<compile_context>
chip_gen: v6e
topology: v6e:2x2x1
jax: 0.10.0
libtpu: 0.0.40
codegen_flags: <defaults>
</compile_context>

<pallas_src>
import functools
import math

import jax
import jax.numpy as jnp
from jax.experimental import pallas as pl
from jax.experimental.pallas import tpu as pltpu


# --------------------------------------------------------------------------
# Kernels
# --------------------------------------------------------------------------
def _se_kernel(x_ref, w1_ref, b1_ref, w2_ref, b2_ref, o_ref, *, inv_len):
    """Single-pass SE gate: one (TB, C, L) slab per grid step."""
    x = x_ref[...]                                                   # (TB, C, L)

    # AdaptiveAvgPool1d(1): mean over length (f32 accumulation).
    pooled = jnp.sum(x.astype(jnp.float32), axis=2) * inv_len        # (TB, C)

    # fc1: (TB, C) x (r, C)^T -> (TB, r)    (both operands lane-dense)
    h = jax.lax.dot_general(
        pooled, w1_ref[...],
        dimension_numbers=(((1,), (1,)), ((), ())),
        preferred_element_type=jnp.float32) + b1_ref[...]            # (TB, r)

    # exact (erf-based) GELU, matching torch.nn.GELU default
    h = 0.5 * h * (1.0 + jax.lax.erf(h * (1.0 / math.sqrt(2.0))))

    # fc2: (TB, r) @ (r, C) -> (TB, C)      (w2 pre-transposed, lane-dense)
    s = jnp.dot(h, w2_ref[...],
                preferred_element_type=jnp.float32) + b2_ref[...]    # (TB, C)
    s = jax.nn.sigmoid(s)

    # Scale the original input, broadcast over L.  Multiply in the input
    # dtype (f32 inputs unchanged; bf16 inputs halve vreg traffic).
    o_ref[...] = x * s.astype(x.dtype)[:, :, None]


def _pool_fc_kernel(x_ref, w1_ref, b1_ref, w2_ref, b2_ref, s_ref, acc_ref, *,
                    inv_len, true_len, l_tile):
    """Fallback pass 1: L-tiled pooled mean + fc1/GELU/fc2/sigmoid -> gate s."""
    li = pl.program_id(1)

    @pl.when(li == 0)
    def _():
        acc_ref[...] = jnp.zeros_like(acc_ref)

    x = x_ref[...].astype(jnp.float32)                               # (TB, C, TL)
    # Mask the padded tail of the last L tile so the sum stays exact.
    col = jax.lax.broadcasted_iota(jnp.int32, x.shape, 2) + li * l_tile
    x = jnp.where(col < true_len, x, 0.0)
    acc_ref[...] += jnp.sum(x, axis=2)                               # (TB, C)

    @pl.when(li == pl.num_programs(1) - 1)
    def _():
        pooled = acc_ref[...] * inv_len                              # (TB, C)
        h = jax.lax.dot_general(
            pooled, w1_ref[...],
            dimension_numbers=(((1,), (1,)), ((), ())),
            preferred_element_type=jnp.float32) + b1_ref[...]        # (TB, r)
        h = 0.5 * h * (1.0 + jax.lax.erf(h * (1.0 / math.sqrt(2.0))))
        s = jnp.dot(h, w2_ref[...],
                    preferred_element_type=jnp.float32) + b2_ref[...]
        s = jax.nn.sigmoid(s)                                        # (TB, C)
        s_ref[...] = s.astype(s_ref.dtype)[:, :, None]               # (TB, C, 1)


def _scale_kernel(s_ref, x_ref, o_ref):
    """Fallback pass 2: stream x and multiply by the per-(B, C) gate."""
    x = x_ref[...]                                                   # (TB, C, TL)
    s = s_ref[...].astype(x.dtype)                                   # (TB, C, 1)
    o_ref[...] = x * s


# --------------------------------------------------------------------------
# Wrapper / tiling heuristics
# --------------------------------------------------------------------------
def _tpu_hw_info():
    """(vmem_capacity_bytes, num_tensorcores_per_device) with safe fallbacks."""
    vmem_cap = 64 << 20      # conservative default (v7x physical VMEM)
    num_tc = 1
    kind = ""
    try:
        kind = jax.devices()[0].device_kind.lower()
    except Exception:
        pass
    got_info = False
    try:
        info = pltpu.get_tpu_info()
        cap = getattr(info, "vmem_capacity_bytes", None)
        if cap:
            vmem_cap = int(cap)
            got_info = True
    except Exception:
        pass
    if not got_info:
        # v5e / v5p / v6e have 128 MiB of VMEM per TensorCore.
        if ("v5" in kind) or ("v6" in kind):
            vmem_cap = 128 << 20
    # Megacore chips (2 TensorCores behind one device): v4 and v7x.
    if ("v4" in kind) or ("v7" in kind) or ("7x" in kind):
        num_tc = 2
    return vmem_cap, num_tc


def squeeze_excite_pallas(x, w1, b1, w2, b2, *,
                          batch_tile=None, length_tile=None, force_split=False):
    """x: (B, C, L); w1: (r, C); b1: (r,); w2: (C, r); b2: (C,) (torch layouts)."""
    B, C, L = x.shape
    r = w1.shape[0]

    # Trace-time operand prep (tiny tensors): lane-dense layouts.
    w1k = w1                                 # (r, C)  -> C on the lane axis
    w2k = jnp.transpose(w2, (1, 0))          # (r, C)  -> C on the lane axis
    b1k = b1.reshape(1, r)
    b2k = b2.reshape(1, C)

    itemsize = jnp.dtype(x.dtype).itemsize
    vmem_cap, num_tc = _tpu_hw_info()

    # Per-chip VMEM budget: leave 16 MiB headroom below physical capacity.
    vmem_limit = int(min(max(32 << 20, vmem_cap - (16 << 20)), vmem_cap))
    param_bytes = 2 * 4 * (w1k.size + w2k.size + b1k.size + b2k.size)
    max_block_bytes = (vmem_limit - param_bytes - (2 << 20)) // 4
    target_block_bytes = min(8 << 20, max_block_bytes)

    per_batch_bytes = C * L * itemsize
    use_split = force_split or (per_batch_bytes > max_block_bytes)

    if not use_split:
        # -------------------- single-pass path --------------------
        if batch_tile is not None:
            TB = int(batch_tile)
        else:
            TB = int(target_block_bytes // per_batch_bytes)
            TB = max(1, min(B, TB))
            # Only reserve grid steps for the second TensorCore on megacore
            # chips (v7x / v4); v5e / v6e have a single TC.
            if num_tc >= 2 and B >= num_tc:
                TB = min(TB, pl.cdiv(B, num_tc))
        TB = max(1, min(TB, B))
        grid = (pl.cdiv(B, TB),)

        kernel = functools.partial(_se_kernel, inv_len=1.0 / L)
        return pl.pallas_call(
            kernel,
            out_shape=jax.ShapeDtypeStruct((B, C, L), x.dtype),
            grid_spec=pltpu.PrefetchScalarGridSpec(
                num_scalar_prefetch=0,
                grid=grid,
                in_specs=[
                    pl.BlockSpec((TB, C, L), lambda b: (b, 0, 0)),   # x
                    pl.BlockSpec((r, C),     lambda b: (0, 0)),      # fc1 weight
                    pl.BlockSpec((1, r),     lambda b: (0, 0)),      # fc1 bias
                    pl.BlockSpec((r, C),     lambda b: (0, 0)),      # fc2 weight^T
                    pl.BlockSpec((1, C),     lambda b: (0, 0)),      # fc2 bias
                ],
                out_specs=pl.BlockSpec((TB, C, L), lambda b: (b, 0, 0)),
            ),
            compiler_params=pltpu.CompilerParams(
                dimension_semantics=("parallel",),
                vmem_limit_bytes=vmem_limit),
        )(x, w1k, b1k, w2k, b2k)

    # -------------------- split (L-tiled) fallback path --------------------
    TB = 1
    if length_tile is not None:
        TL = int(length_tile)
    else:
        TL = int(target_block_bytes // (C * itemsize))
        TL = max(128, (TL // 128) * 128)
    if TL >= L:
        TL = L                      # full-extent last dim (always legal)
    nl = pl.cdiv(L, TL)
    grid = (B, nl)

    pool_kernel = functools.partial(
        _pool_fc_kernel, inv_len=1.0 / L, true_len=L, l_tile=TL)

    s = pl.pallas_call(
        pool_kernel,
        out_shape=jax.ShapeDtypeStruct((B, C, 1), jnp.float32),
        grid_spec=pltpu.PrefetchScalarGridSpec(
            num_scalar_prefetch=0,
            grid=grid,
            in_specs=[
                pl.BlockSpec((TB, C, TL), lambda b, l: (b, 0, l)),   # x
                pl.BlockSpec((r, C),      lambda b, l: (0, 0)),      # fc1 weight
                pl.BlockSpec((1, r),      lambda b, l: (0, 0)),      # fc1 bias
                pl.BlockSpec((r, C),      lambda b, l: (0, 0)),      # fc2 weight^T
                pl.BlockSpec((1, C),      lambda b, l: (0, 0)),      # fc2 bias
            ],
            out_specs=pl.BlockSpec((TB, C, 1), lambda b, l: (b, 0, 0)),
            scratch_shapes=[pltpu.VMEM((TB, C), jnp.float32)],
        ),
        compiler_params=pltpu.CompilerParams(
            dimension_semantics=("parallel", "arbitrary"),
            vmem_limit_bytes=vmem_limit),
    )(x, w1k, b1k, w2k, b2k)

    return pl.pallas_call(
        _scale_kernel,
        out_shape=jax.ShapeDtypeStruct((B, C, L), x.dtype),
        grid_spec=pltpu.PrefetchScalarGridSpec(
            num_scalar_prefetch=0,
            grid=grid,
            in_specs=[
                pl.BlockSpec((TB, C, 1),  lambda b, l: (b, 0, 0)),   # gate s
                pl.BlockSpec((TB, C, TL), lambda b, l: (b, 0, l)),   # x
            ],
            out_specs=pl.BlockSpec((TB, C, TL), lambda b, l: (b, 0, l)),
        ),
        compiler_params=pltpu.CompilerParams(
            dimension_semantics=("parallel", "parallel"),
            vmem_limit_bytes=vmem_limit),
    )(s, x)


# --------------------------------------------------------------------------
# Pure-JAX reference (mirrors the PyTorch forward, torch layouts)
# --------------------------------------------------------------------------
def squeeze_excite_ref(x, w1, b1, w2, b2):
    pooled = jnp.mean(x, axis=2, keepdims=True)            # (B, C, 1)
    t = jnp.transpose(pooled, (0, 2, 1))                   # (B, 1, C)
    h = jnp.einsum("boc,rc->bor", t, w1) + b1              # (B, 1, r)
    h = jax.nn.gelu(h, approximate=False)
    s = jnp.einsum("bor,cr->boc", h, w2) + b2              # (B, 1, C)
    s = jax.nn.sigmoid(s)
    return x * jnp.transpose(s, (0, 2, 1))                 # (B, C, L)


if __name__ == "__main__":
    r = 32  # convblock SE stage: squeeze=32 -> reductionsize = 32

    def make_inputs(key, B, C, L):
        kx, k1w, k1b, k2w, k2b = jax.random.split(key, 5)
        x = jax.random.normal(kx, (B, C, L), dtype=jnp.float32)
        bound1 = 1.0 / math.sqrt(C)
        w1 = jax.random.uniform(k1w, (r, C), minval=-bound1, maxval=bound1,
                                dtype=jnp.float32)
        b1 = jax.random.uniform(k1b, (r,), minval=-bound1, maxval=bound1,
                                dtype=jnp.float32)
        xav = math.sqrt(6.0 / (r + C))
        w2 = jax.random.uniform(k2w, (C, r), minval=-xav, maxval=xav,
                                dtype=jnp.float32)
        bound2 = 1.0 / math.sqrt(r)
        b2 = jax.random.uniform(k2b, (C,), minval=-bound2, maxval=bound2,
                                dtype=jnp.float32)
        return x, w1, b1, w2, b2

    key = jax.random.PRNGKey(0)
    k_a, k_b, k_c = jax.random.split(key, 3)

    # Case A: default single-pass path (L multiple of 128).
    xa, w1a, b1a, w2a, b2a = make_inputs(k_a, 8, 128, 256)
    out_a = jax.block_until_ready(squeeze_excite_pallas(xa, w1a, b1a, w2a, b2a))
    ref_a = squeeze_excite_ref(xa, w1a, b1a, w2a, b2a)
    assert out_a.shape == xa.shape
    assert jnp.allclose(out_a, ref_a, atol=1e-5, rtol=1e-5), "case A mismatch"

    # Case B: single-pass path, L not a multiple of 128, partial tail batch
    # block (cdiv grid).
    xb, w1b, b1b, w2b, b2b = make_inputs(k_b, 5, 128, 200)
    out_b = jax.block_until_ready(
        squeeze_excite_pallas(xb, w1b, b1b, w2b, b2b, batch_tile=2))
    ref_b = squeeze_excite_ref(xb, w1b, b1b, w2b, b2b)
    assert jnp.allclose(out_b, ref_b, atol=1e-5, rtol=1e-5), "case B mismatch"

    # Case C: forced L-tiled fallback (pool+FC kernel with masked tail tile,
    # then streaming scale kernel).
    xc, w1c, b1c, w2c, b2c = make_inputs(k_c, 3, 128, 200)
    out_c = jax.block_until_ready(
        squeeze_excite_pallas(xc, w1c, b1c, w2c, b2c,
                              force_split=True, length_tile=128))
    ref_c = squeeze_excite_ref(xc, w1c, b1c, w2c, b2c)
    assert jnp.allclose(out_c, ref_c, atol=1e-5, rtol=1e-5), "case C mismatch"

    print("KERNEL_OK")
</pallas_src>

<mosaic_0001>
module attributes {stable_mosaic.version = 11 : i64} {
  func.func @_se_kernel(%arg0: i32, %arg1: memref<8x128x256xf32, #tpu.memory_space<vmem>>, %arg2: memref<32x128xf32, #tpu.memory_space<vmem>>, %arg3: memref<1x32xf32, #tpu.memory_space<vmem>>, %arg4: memref<32x128xf32, #tpu.memory_space<vmem>>, %arg5: memref<1x128xf32, #tpu.memory_space<vmem>>, %arg6: memref<8x128x256xf32, #tpu.memory_space<vmem>>) attributes {dimension_semantics = [#tpu.dimension_semantics<parallel>], iteration_bounds = array<i64: 1>, scalar_prefetch = 0 : i64, scratch_operands = 0 : i64, tpu.core_type = #tpu.core_type<tc>, window_params = [{transform_indices = @transform_0, window_bounds = array<i64: 8, 128, 256>}, {pipeline_mode = #tpu.pipeline_mode<synchronous>, transform_indices = @transform_1, window_bounds = array<i64: 32, 128>}, {pipeline_mode = #tpu.pipeline_mode<synchronous>, transform_indices = @transform_2, window_bounds = array<i64: 1, 32>}, {pipeline_mode = #tpu.pipeline_mode<synchronous>, transform_indices = @transform_3, window_bounds = array<i64: 32, 128>}, {pipeline_mode = #tpu.pipeline_mode<synchronous>, transform_indices = @transform_4, window_bounds = array<i64: 1, 128>}, {transform_indices = @transform_5, window_bounds = array<i64: 8, 128, 256>}]} {
    %c0 = arith.constant 0 : index
    %c0_0 = arith.constant 0 : index
    %c0_1 = arith.constant 0 : index
    %0 = vector.load %arg1[%c0, %c0_0, %c0_1] : memref<8x128x256xf32, #tpu.memory_space<vmem>>, vector<8x128x256xf32>
    %cst = arith.constant dense<0.000000e+00> : vector<8x128xf32>
    %1 = vector.multi_reduction <add>, %0, %cst [2] : vector<8x128x256xf32> to vector<8x128xf32>
    %cst_2 = arith.constant 3.906250e-03 : f32
    %2 = vector.broadcast %cst_2 : f32 to vector<8x128xf32>
    %3 = arith.mulf %1, %2 : vector<8x128xf32>
    %c0_3 = arith.constant 0 : index
    %c0_4 = arith.constant 0 : index
    %4 = vector.load %arg2[%c0_3, %c0_4] : memref<32x128xf32, #tpu.memory_space<vmem>>, vector<32x128xf32>
    %cst_5 = arith.constant dense<0.000000e+00> : vector<8x32xf32>
    %5 = tpu.matmul %3, %4, %cst_5 {dimension_numbers = #tpu.dot_dimension_numbers<[1], [1], [0], [0], [0, 0, 1, 0], [], []>} : vector<8x128xf32>, vector<32x128xf32>, vector<8x32xf32> -> vector<8x32xf32>
    %c0_6 = arith.constant 0 : index
    %c0_7 = arith.constant 0 : index
    %6 = vector.load %arg3[%c0_6, %c0_7] : memref<1x32xf32, #tpu.memory_space<vmem>>, vector<1x32xf32>
    %7 = vector.broadcast %6 : vector<1x32xf32> to vector<8x32xf32>
    %8 = arith.addf %5, %7 : vector<8x32xf32>
    %cst_8 = arith.constant 5.000000e-01 : f32
    %9 = vector.broadcast %cst_8 : f32 to vector<8x32xf32>
    %10 = arith.mulf %9, %8 : vector<8x32xf32>
    %cst_9 = arith.constant 0.707106769 : f32
    %11 = vector.broadcast %cst_9 : f32 to vector<8x32xf32>
    %12 = arith.mulf %8, %11 : vector<8x32xf32>
    %13 = math.erf %12 : vector<8x32xf32>
    %cst_10 = arith.constant 1.000000e+00 : f32
    %14 = vector.broadcast %cst_10 : f32 to vector<8x32xf32>
    %15 = arith.addf %14, %13 : vector<8x32xf32>
    %16 = arith.mulf %10, %15 : vector<8x32xf32>
    %c0_11 = arith.constant 0 : index
    %c0_12 = arith.constant 0 : index
    %17 = vector.load %arg4[%c0_11, %c0_12] : memref<32x128xf32, #tpu.memory_space<vmem>>, vector<32x128xf32>
    %cst_13 = arith.constant dense<0.000000e+00> : vector<8x128xf32>
    %18 = tpu.matmul %16, %17, %cst_13 {dimension_numbers = #tpu.dot_dimension_numbers<[1], [0], [0], [1], [0, 0, 1, 1], [], []>} : vector<8x32xf32>, vector<32x128xf32>, vector<8x128xf32> -> vector<8x128xf32>
    %c0_14 = arith.constant 0 : index
    %c0_15 = arith.constant 0 : index
    %19 = vector.load %arg5[%c0_14, %c0_15] : memref<1x128xf32, #tpu.memory_space<vmem>>, vector<1x128xf32>
    %20 = vector.broadcast %19 : vector<1x128xf32> to vector<8x128xf32>
    %21 = arith.addf %18, %20 : vector<8x128xf32>
    %22 = arith.negf %21 : vector<8x128xf32>
    %23 = math.exp %22 : vector<8x128xf32>
    %cst_16 = arith.constant 1.000000e+00 : f32
    %24 = vector.broadcast %cst_16 : f32 to vector<8x128xf32>
    %25 = arith.addf %24, %23 : vector<8x128xf32>
    %26 = arith.divf %24, %25 : vector<8x128xf32>
    %27 = vector.shape_cast %26 : vector<8x128xf32> to vector<8x128x1xf32>
    %28 = vector.broadcast %27 : vector<8x128x1xf32> to vector<8x128x256xf32>
    %29 = arith.mulf %0, %28 : vector<8x128x256xf32>
    %c0_17 = arith.constant 0 : index
    %c0_18 = arith.constant 0 : index
    %c0_19 = arith.constant 0 : index
    %30 = vector.load %arg6[%c0_17, %c0_18, %c0_19] : memref<8x128x256xf32, #tpu.memory_space<vmem>>, vector<8x128x256xf32>
    tpu.vector_store %arg6[%c0_17, %c0_18, %c0_19], %29 {strides = array<i32>} : memref<8x128x256xf32, #tpu.memory_space<vmem>>, vector<8x128x256xf32>,
    return
  }
  func.func @transform_0(%arg0: i32) -> (i32, i32, i32) {
    %c0_i32 = arith.constant 0 : i32
    %c0_i32_0 = arith.constant 0 : i32
    %c0_i32_1 = arith.constant 0 : i32
    return %arg0, %c0_i32, %c0_i32_0 : i32, i32, i32
  }
  func.func @transform_1(%arg0: i32) -> (i32, i32) {
    %c0_i32 = arith.constant 0 : i32
    %c0_i32_0 = arith.constant 0 : i32
    %c0_i32_1 = arith.constant 0 : i32
    return %c0_i32, %c0_i32_0 : i32, i32
  }
  func.func @transform_2(%arg0: i32) -> (i32, i32) {
    %c0_i32 = arith.constant 0 : i32
    %c0_i32_0 = arith.constant 0 : i32
    %c0_i32_1 = arith.constant 0 : i32
    return %c0_i32, %c0_i32_0 : i32, i32
  }
  func.func @transform_3(%arg0: i32) -> (i32, i32) {
    %c0_i32 = arith.constant 0 : i32
    %c0_i32_0 = arith.constant 0 : i32
    %c0_i32_1 = arith.constant 0 : i32
    return %c0_i32, %c0_i32_0 : i32, i32
  }
  func.func @transform_4(%arg0: i32) -> (i32, i32) {
    %c0_i32 = arith.constant 0 : i32
    %c0_i32_0 = arith.constant 0 : i32
    %c0_i32_1 = arith.constant 0 : i32
    return %c0_i32, %c0_i32_0 : i32, i32
  }
  func.func @transform_5(%arg0: i32) -> (i32, i32, i32) {
    %c0_i32 = arith.constant 0 : i32
    %c0_i32_0 = arith.constant 0 : i32
    %c0_i32_1 = arith.constant 0 : i32
    return %arg0, %c0_i32, %c0_i32_0 : i32, i32, i32
  }
}

</mosaic_0001>

<llo_original>
// kernel: tpu_custom_call.1
$region0: #{tpu_custom_call.1}
  #allocation0 [shape = 'u32[]', space=smem, size = 0x4, offset = 0x4, fixed_abs, tag = 'smem constant byte address 0x4 - core index']
  #allocation1 [shape = 'u32[144,128]{1,0:T(1,128)}', space=vmem, size = 0x12000, scoped, tag = 'internal scratch']
  %s0 = inlined_call_operand.hbm [shape: f32[8,128,256], index: 0, kind: input, shape index: {}]
  %s1 = inlined_call_operand.hbm [shape: f32[32,128], index: 1, kind: input, shape index: {}]
  %s2 = inlined_call_operand.vmem [shape: f32[1,32], index: 2, kind: input, shape index: {}]
  %s3 = inlined_call_operand.hbm [shape: f32[32,128], index: 3, kind: input, shape index: {}]
  %s4 = inlined_call_operand.vmem [shape: f32[1,128], index: 4, kind: input, shape index: {}]
  %s5 = inlined_call_operand.hbm [shape: f32[8,128,256], index: 5, kind: output, shape index: {}]
  %s6 = sld [smem:[#allocation0]]
  $region42: #{tpu_custom_call.1} parent=0
    _
  %s8 = ssub.s32 1, %s6
  %s9 = scalar_select 0, %s8, %s6
  $region1: #{tpu_custom_call.1} parent=0
    #allocation2 [shape = 'u8[1048576]{0}', space=vmem, size = 0x100000, scoped, tag = 'input window, operand 0, single buffered']
    #allocation3 [shape = 's32[1]{0}', space=sflag, size = 0x4, scoped, tag = 'scoped memory for tpu_custom_call.1']
    #allocation4 [shape = 's32[1]{0}', space=sflag, size = 0x4, scoped, tag = 'scoped memory for tpu_custom_call.1']
    #allocation5 [shape = 'u8[16384]{0}', space=vmem, size = 0x4000, scoped, tag = 'input window, operand 1, single buffered']
    #allocation6 [shape = 's32[1]{0}', space=sflag, size = 0x4, scoped, tag = 'scoped memory for tpu_custom_call.1']
    #allocation7 [shape = 'u8[16384]{0}', space=vmem, size = 0x4000, scoped, tag = 'input window, operand 3, single buffered']
    #allocation8 [shape = 'u8[1048576]{0}', space=vmem, size = 0x100000, scoped, tag = 'output window, operand 0, single buffered']
    %10 = vsyncpa [#allocation3], 0
    %11 = vsyncpa [#allocation6], 0
    %12 = vsyncpa [#allocation4], 0
    // Predicated region
    $region2: #{tpu_custom_call.1} parent=1 // pred_check
      _
    $region3: #{tpu_custom_call.1} parent=1 // pred_check_branch
      %14 = sbr.rel (0) target = $region5
    $region4: #{tpu_custom_call.1} parent=1 // pred_region
      %s16 = ssub.s32 32768, 32768
      %17 = vsyncadd [#allocation3], %s16
      %s18 = sshll.u32 [#allocation2], 4
      %s19 = int_to_ptr.vmem [resolvable:$true] %s18
      %24 = dma.hbm_to_vmem [thread:$0]  %s0, 32768, %s19, [#allocation3], 256, 256, 16
    $region5: #{tpu_custom_call.1} parent=1 // pred_fallthru
      _
    // Predicated region
    $region6: #{tpu_custom_call.1} parent=1 // pred_check
      _
    $region7: #{tpu_custom_call.1} parent=1 // pred_check_branch
      %26 = sbr.rel (0) target = $region9
    $region8: #{tpu_custom_call.1} parent=1 // pred_region
      %s28 = ssub.s32 512, 512
      %29 = vsyncadd [#allocation6], %s28
      %s30 = sshll.u32 [#allocation5], 4
      %s31 = int_to_ptr.vmem [resolvable:$true] %s30
      %36 = dma.hbm_to_vmem [thread:$0]  %s1, 512, %s31, [#allocation6], 128, 128, 8
    $region9: #{tpu_custom_call.1} parent=1 // pred_fallthru
      _
    // Predicated region
    $region10: #{tpu_custom_call.1} parent=1 // pred_check
      _
    $region11: #{tpu_custom_call.1} parent=1 // pred_check_branch
      %38 = sbr.rel (0) target = $region13
    $region12: #{tpu_custom_call.1} parent=1 // pred_region
      _
    $region13: #{tpu_custom_call.1} parent=1 // pred_fallthru
      _
    // Predicated region
    $region14: #{tpu_custom_call.1} parent=1 // pred_check
      _
    $region15: #{tpu_custom_call.1} parent=1 // pred_check_branch
      %40 = sbr.rel (0) target = $region17
    $region16: #{tpu_custom_call.1} parent=1 // pred_region
      %s42 = ssub.s32 512, 512
      %43 = vsyncadd [#allocation6], %s42
      %s44 = sshll.u32 [#allocation7], 4
      %s45 = int_to_ptr.vmem [resolvable:$true] %s44
      %50 = dma.hbm_to_vmem [thread:$0]  %s3, 512, %s45, [#allocation6], 128, 128, 8
    $region17: #{tpu_custom_call.1} parent=1 // pred_fallthru
      _
    // Predicated region
    $region18: #{tpu_custom_call.1} parent=1 // pred_check
      _
    $region19: #{tpu_custom_call.1} parent=1 // pred_check_branch
      %52 = sbr.rel (0) target = $region21
    $region20: #{tpu_custom_call.1} parent=1 // pred_region
      _
    $region21: #{tpu_custom_call.1} parent=1 // pred_fallthru
      _
    // Predicated region
    $region22: #{tpu_custom_call.1} parent=1 // pred_check
      _
    $region23: #{tpu_custom_call.1} parent=1 // pred_check_branch
      %54 = sbr.rel (0) target = $region25
    $region24: #{tpu_custom_call.1} parent=1 // pred_region
      %55 = dma.done [#allocation3], 32768
    $region25: #{tpu_custom_call.1} parent=1 // pred_fallthru
      _
    // Predicated region
    $region26: #{tpu_custom_call.1} parent=1 // pred_check
      _
    $region27: #{tpu_custom_call.1} parent=1 // pred_check_branch
      %57 = sbr.rel (0) target = $region29
    $region28: #{tpu_custom_call.1} parent=1 // pred_region
      %58 = dma.done [#allocation6], 512
    $region29: #{tpu_custom_call.1} parent=1 // pred_fallthru
      _
    // Predicated region
    $region30: #{tpu_custom_call.1} parent=1 // pred_check
      _
    $region31: #{tpu_custom_call.1} parent=1 // pred_check_branch
      %60 = sbr.rel (0) target = $region33
    $region32: #{tpu_custom_call.1} parent=1 // pred_region
      %61 = dma.done [#allocation6], 512
    $region33: #{tpu_custom_call.1} parent=1 // pred_fallthru
      _
    %v62 = vld [vmem:[#allocation2] sm:$0xff]
    %v63 = vld [vmem:[#allocation2 + $0x8] sm:$0xff]
    %v64 = vld [vmem:[#allocation2 + $0x10] sm:$0xff]
    %v65 = vld [vmem:[#allocation2 + $0x18] sm:$0xff]
    %v66 = vld [vmem:[#allocation2 + $0x20] sm:$0xff]
    %v67 = vld [vmem:[#allocation2 + $0x28] sm:$0xff]
    %v68 = vld [vmem:[#allocation2 + $0x30] sm:$0xff]
    %v69 = vld [vmem:[#allocation2 + $0x38] sm:$0xff]
    %v70 = vld [vmem:[#allocation2 + $0x40] sm:$0xff]
    %v71 = vld [vmem:[#allocation2 + $0x48] sm:$0xff]
    %v72 = vld [vmem:[#allocation2 + $0x50] sm:$0xff]
    %v73 = vld [vmem:[#allocation2 + $0x58] sm:$0xff]
    %v74 = vld [vmem:[#allocation2 + $0x60] sm:$0xff]
    %v75 = vld [vmem:[#allocation2 + $0x68] sm:$0xff]
    %v76 = vld [vmem:[#allocation2 + $0x70] sm:$0xff]
    %v77 = vld [vmem:[#allocation2 + $0x78] sm:$0xff]
    %v78 = vld [vmem:[#allocation2 + $0x80] sm:$0xff]
    %v79 = vld [vmem:[#allocation2 + $0x88] sm:$0xff]
    %v80 = vld [vmem:[#allocation2 + $0x90] sm:$0xff]
    %v81 = vld [vmem:[#allocation2 + $0x98] sm:$0xff]
    %v82 = vld [vmem:[#allocation2 + $0xa0] sm:$0xff]
    %v83 = vld [vmem:[#allocation2 + $0xa8] sm:$0xff]
    %v84 = vld [vmem:[#allocation2 + $0xb0] sm:$0xff]
    %v85 = vld [vmem:[#allocation2 + $0xb8] sm:$0xff]
    %v86 = vld [vmem:[#allocation2 + $0xc0] sm:$0xff]
    %v87 = vld [vmem:[#allocation2 + $0xc8] sm:$0xff]
    %v88 = vld [vmem:[#allocation2 + $0xd0] sm:$0xff]
    %v89 = vld [vmem:[#allocation2 + $0xd8] sm:$0xff]
    %v90 = vld [vmem:[#allocation2 + $0xe0] sm:$0xff]
    %v91 = vld [vmem:[#allocation2 + $0xe8] sm:$0xff]
    %v92 = vld [vmem:[#allocation2 + $0xf0] sm:$0xff]
    %v93 = vld [vmem:[#allocation2 + $0xf8] sm:$0xff]
    %v94 = vld [vmem:[#allocation2 + $0x100] sm:$0xff]
    %v95 = vld [vmem:[#allocation2 + $0x108] sm:$0xff]
    %v96 = vld [vmem:[#allocation2 + $0x110] sm:$0xff]
    %v97 = vld [vmem:[#allocation2 + $0x118] sm:$0xff]
    %v98 = vld [vmem:[#allocation2 + $0x120] sm:$0xff]
    %v99 = vld [vmem:[#allocation2 + $0x128] sm:$0xff]
    %v100 = vld [vmem:[#allocation2 + $0x130] sm:$0xff]
    %v101 = vld [vmem:[#allocation2 + $0x138] sm:$0xff]
    %v102 = vld [vmem:[#allocation2 + $0x140] sm:$0xff]
    %v103 = vld [vmem:[#allocation2 + $0x148] sm:$0xff]
    %v104 = vld [vmem:[#allocation2 + $0x150] sm:$0xff]
    %v105 = vld [vmem:[#allocation2 + $0x158] sm:$0xff]
    %v106 = vld [vmem:[#allocation2 + $0x160] sm:$0xff]
    %v107 = vld [vmem:[#allocation2 + $0x168] sm:$0xff]
    %v108 = vld [vmem:[#allocation2 + $0x170] sm:$0xff]
    %v109 = vld [vmem:[#allocation2 + $0x178] sm:$0xff]
    %v110 = vld [vmem:[#allocation2 + $0x180] sm:$0xff]
    %v111 = vld [vmem:[#allocation2 + $0x188] sm:$0xff]
    %v112 = vld [vmem:[#allocation2 + $0x190] sm:$0xff]
    %v113 = vld [vmem:[#allocation2 + $0x198] sm:$0xff]
    %v114 = vld [vmem:[#allocation2 + $0x1a0] sm:$0xff]
    %v115 = vld [vmem:[#allocation2 + $0x1a8] sm:$0xff]
    %v116 = vld [vmem:[#allocation2 + $0x1b0] sm:$0xff]
    %v117 = vld [vmem:[#allocation2 + $0x1b8] sm:$0xff]
    %v118 = vld [vmem:[#allocation2 + $0x1c0] sm:$0xff]
    %v119 = vld [vmem:[#allocation2 + $0x1c8] sm:$0xff]
    %v120 = vld [vmem:[#allocation2 + $0x1d0] sm:$0xff]
    %v121 = vld [vmem:[#allocation2 + $0x1d8] sm:$0xff]
    %v122 = vld [vmem:[#allocation2 + $0x1e0] sm:$0xff]
    %v123 = vld [vmem:[#allocation2 + $0x1e8] sm:$0xff]
    %v124 = vld [vmem:[#allocation2 + $0x1f0] sm:$0xff]
    %v125 = vld [vmem:[#allocation2 + $0x1f8] sm:$0xff]
    %v126 = vld [vmem:[#allocation2 + $0x200] sm:$0xff]
    %v127 = vld [vmem:[#allocation2 + $0x208] sm:$0xff]
    %v128 = vld [vmem:[#allocation2 + $0x210] sm:$0xff]
    %v129 = vld [vmem:[#allocation2 + $0x218] sm:$0xff]
    %v130 = vld [vmem:[#allocation2 + $0x220] sm:$0xff]
    %v131 = vld [vmem:[#allocation2 + $0x228] sm:$0xff]
    %v132 = vld [vmem:[#allocation2 + $0x230] sm:$0xff]
    %v133 = vld [vmem:[#allocation2 + $0x238] sm:$0xff]
    %v134 = vld [vmem:[#allocation2 + $0x240] sm:$0xff]
    %v135 = vld [vmem:[#allocation2 + $0x248] sm:$0xff]
    %v136 = vld [vmem:[#allocation2 + $0x250] sm:$0xff]
    %v137 = vld [vmem:[#allocation2 + $0x258] sm:$0xff]
    %v138 = vld [vmem:[#allocation2 + $0x260] sm:$0xff]
    %v139 = vld [vmem:[#allocation2 + $0x268] sm:$0xff]
    %v140 = vld [vmem:[#allocation2 + $0x270] sm:$0xff]
    %v141 = vld [vmem:[#allocation2 + $0x278] sm:$0xff]
    %v142 = vld [vmem:[#allocation2 + $0x280] sm:$0xff]
    %v143 = vld [vmem:[#allocation2 + $0x288] sm:$0xff]
    %v144 = vld [vmem:[#allocation2 + $0x290] sm:$0xff]
    %v145 = vld [vmem:[#allocation2 + $0x298] sm:$0xff]
    %v146 = vld [vmem:[#allocation2 + $0x2a0] sm:$0xff]
    %v147 = vld [vmem:[#allocation2 + $0x2a8] sm:$0xff]
    %v148 = vld [vmem:[#allocation2 + $0x2b0] sm:$0xff]
    %v149 = vld [vmem:[#allocation2 + $0x2b8] sm:$0xff]
    %v150 = vld [vmem:[#allocation2 + $0x2c0] sm:$0xff]
    %v151 = vld [vmem:[#allocation2 + $0x2c8] sm:$0xff]
    %v152 = vld [vmem:[#allocation2 + $0x2d0] sm:$0xff]
    %v153 = vld [vmem:[#allocation2 + $0x2d8] sm:$0xff]
    %v154 = vld [vmem:[#allocation2 + $0x2e0] sm:$0xff]
    %v155 = vld [vmem:[#allocation2 + $0x2e8] sm:$0xff]
    %v156 = vld [vmem:[#allocation2 + $0x2f0] sm:$0xff]
    %v157 = vld [vmem:[#allocation2 + $0x2f8] sm:$0xff]
    %v158 = vld [vmem:[#allocation2 + $0x300] sm:$0xff]
    %v159 = vld [vmem:[#allocation2 + $0x308] sm:$0xff]
    %v160 = vld [vmem:[#allocation2 + $0x310] sm:$0xff]
    %v161 = vld [vmem:[#allocation2 + $0x318] sm:$0xff]
    %v162 = vld [vmem:[#allocation2 + $0x320] sm:$0xff]
    %v163 = vld [vmem:[#allocation2 + $0x328] sm:$0xff]
    %v164 = vld [vmem:[#allocation2 + $0x330] sm:$0xff]
    %v165 = vld [vmem:[#allocation2 + $0x338] sm:$0xff]
    %v166 = vld [vmem:[#allocation2 + $0x340] sm:$0xff]
    %v167 = vld [vmem:[#allocation2 + $0x348] sm:$0xff]
    %v168 = vld [vmem:[#allocation2 + $0x350] sm:$0xff]
    %v169 = vld [vmem:[#allocation2 + $0x358] sm:$0xff]
    %v170 = vld [vmem:[#allocation2 + $0x360] sm:$0xff]
    %v171 = vld [vmem:[#allocation2 + $0x368] sm:$0xff]
    %v172 = vld [vmem:[#allocation2 + $0x370] sm:$0xff]
    %v173 = vld [vmem:[#allocation2 + $0x378] sm:$0xff]
    %v174 = vld [vmem:[#allocation2 + $0x380] sm:$0xff]
    %v175 = vld [vmem:[#allocation2 + $0x388] sm:$0xff]
    %v176 = vld [vmem:[#allocation2 + $0x390] sm:$0xff]
    %v177 = vld [vmem:[#allocation2 + $0x398] sm:$0xff]
    %v178 = vld [vmem:[#allocation2 + $0x3a0] sm:$0xff]
    %v179 = vld [vmem:[#allocation2 + $0x3a8] sm:$0xff]
    %v180 = vld [vmem:[#allocation2 + $0x3b0] sm:$0xff]
    %v181 = vld [vmem:[#allocation2 + $0x3b8] sm:$0xff]
    %v182 = vld [vmem:[#allocation2 + $0x3c0] sm:$0xff]
    %v183 = vld [vmem:[#allocation2 + $0x3c8] sm:$0xff]
    %v184 = vld [vmem:[#allocation2 + $0x3d0] sm:$0xff]
    %v185 = vld [vmem:[#allocation2 + $0x3d8] sm:$0xff]
    %v186 = vld [vmem:[#allocation2 + $0x3e0] sm:$0xff]
    %v187 = vld [vmem:[#allocation2 + $0x3e8] sm:$0xff]
    %v188 = vld [vmem:[#allocation2 + $0x3f0] sm:$0xff]
    %v189 = vld [vmem:[#allocation2 + $0x3f8] sm:$0xff]
    %v190 = vld [vmem:[#allocation2 + $0x400] sm:$0xff]
    %v191 = vld [vmem:[#allocation2 + $0x408] sm:$0xff]
    %v192 = vld [vmem:[#allocation2 + $0x410] sm:$0xff]
    %v193 = vld [vmem:[#allocation2 + $0x418] sm:$0xff]
    %v194 = vld [vmem:[#allocation2 + $0x420] sm:$0xff]
    %v195 = vld [vmem:[#allocation2 + $0x428] sm:$0xff]
    %v196 = vld [vmem:[#allocation2 + $0x430] sm:$0xff]
    %v197 = vld [vmem:[#allocation2 + $0x438] sm:$0xff]
    %v198 = vld [vmem:[#allocation2 + $0x440] sm:$0xff]
    %v199 = vld [vmem:[#allocation2 + $0x448] sm:$0xff]
    %v200 = vld [vmem:[#allocation2 + $0x450] sm:$0xff]
    %v201 = vld [vmem:[#allocation2 + $0x458] sm:$0xff]
    %v202 = vld [vmem:[#allocation2 + $0x460] sm:$0xff]
    %v203 = vld [vmem:[#allocation2 + $0x468] sm:$0xff]
    %v204 = vld [vmem:[#allocation2 + $0x470] sm:$0xff]
    %v205 = vld [vmem:[#allocation2 + $0x478] sm:$0xff]
    %v206 = vld [vmem:[#allocation2 + $0x480] sm:$0xff]
    %v207 = vld [vmem:[#allocation2 + $0x488] sm:$0xff]
    %v208 = vld [vmem:[#allocation2 + $0x490] sm:$0xff]
    %v209 = vld [vmem:[#allocation2 + $0x498] sm:$0xff]
    %v210 = vld [vmem:[#allocation2 + $0x4a0] sm:$0xff]
    %v211 = vld [vmem:[#allocation2 + $0x4a8] sm:$0xff]
    %v212 = vld [vmem:[#allocation2 + $0x4b0] sm:$0xff]
    %v213 = vld [vmem:[#allocation2 + $0x4b8] sm:$0xff]
    %v214 = vld [vmem:[#allocation2 + $0x4c0] sm:$0xff]
    %v215 = vld [vmem:[#allocation2 + $0x4c8] sm:$0xff]
    %v216 = vld [vmem:[#allocation2 + $0x4d0] sm:$0xff]
    %v217 = vld [vmem:[#allocation2 + $0x4d8] sm:$0xff]
    %v218 = vld [vmem:[#allocation2 + $0x4e0] sm:$0xff]
    %v219 = vld [vmem:[#allocation2 + $0x4e8] sm:$0xff]
    %v220 = vld [vmem:[#allocation2 + $0x4f0] sm:$0xff]
    %v221 = vld [vmem:[#allocation2 + $0x4f8] sm:$0xff]
    %v222 = vld [vmem:[#allocation2 + $0x500] sm:$0xff]
    %v223 = vld [vmem:[#allocation2 + $0x508] sm:$0xff]
    %v224 = vld [vmem:[#allocation2 + $0x510] sm:$0xff]
    %v225 = vld [vmem:[#allocation2 + $0x518] sm:$0xff]
    %v226 = vld [vmem:[#allocation2 + $0x520] sm:$0xff]
    %v227 = vld [vmem:[#allocation2 + $0x528] sm:$0xff]
    %v228 = vld [vmem:[#allocation2 + $0x530] sm:$0xff]
    %v229 = vld [vmem:[#allocation2 + $0x538] sm:$0xff]
    %v230 = vld [vmem:[#allocation2 + $0x540] sm:$0xff]
    %v231 = vld [vmem:[#allocation2 + $0x548] sm:$0xff]
    %v232 = vld [vmem:[#allocation2 + $0x550] sm:$0xff]
    %v233 = vld [vmem:[#allocation2 + $0x558] sm:$0xff]
    %v234 = vld [vmem:[#allocation2 + $0x560] sm:$0xff]
    %v235 = vld [vmem:[#allocation2 + $0x568] sm:$0xff]
    %v236 = vld [vmem:[#allocation2 + $0x570] sm:$0xff]
    %v237 = vld [vmem:[#allocation2 + $0x578] sm:$0xff]
    %v238 = vld [vmem:[#allocation2 + $0x580] sm:$0xff]
    %v239 = vld [vmem:[#allocation2 + $0x588] sm:$0xff]
    %v240 = vld [vmem:[#allocation2 + $0x590] sm:$0xff]
    %v241 = vld [vmem:[#allocation2 + $0x598] sm:$0xff]
    %v242 = vld [vmem:[#allocation2 + $0x5a0] sm:$0xff]
    %v243 = vld [vmem:[#allocation2 + $0x5a8] sm:$0xff]
    %v244 = vld [vmem:[#allocation2 + $0x5b0] sm:$0xff]
    %v245 = vld [vmem:[#allocation2 + $0x5b8] sm:$0xff]
    %v246 = vld [vmem:[#allocation2 + $0x5c0] sm:$0xff]
    %v247 = vld [vmem:[#allocation2 + $0x5c8] sm:$0xff]
    %v248 = vld [vmem:[#allocation2 + $0x5d0] sm:$0xff]
    %v249 = vld [vmem:[#allocation2 + $0x5d8] sm:$0xff]
    %v250 = vld [vmem:[#allocation2 + $0x5e0] sm:$0xff]
    %v251 = vld [vmem:[#allocation2 + $0x5e8] sm:$0xff]
    %v252 = vld [vmem:[#allocation2 + $0x5f0] sm:$0xff]
    %v253 = vld [vmem:[#allocation2 + $0x5f8] sm:$0xff]
    %v254 = vld [vmem:[#allocation2 + $0x600] sm:$0xff]
    %v255 = vld [vmem:[#allocation2 + $0x608] sm:$0xff]
    %v256 = vld [vmem:[#allocation2 + $0x610] sm:$0xff]
    %v257 = vld [vmem:[#allocation2 + $0x618] sm:$0xff]
    %v258 = vld [vmem:[#allocation2 + $0x620] sm:$0xff]
    %v259 = vld [vmem:[#allocation2 + $0x628] sm:$0xff]
    %v260 = vld [vmem:[#allocation2 + $0x630] sm:$0xff]
    %v261 = vld [vmem:[#allocation2 + $0x638] sm:$0xff]
    %v262 = vld [vmem:[#allocation2 + $0x640] sm:$0xff]
    %v263 = vld [vmem:[#allocation2 + $0x648] sm:$0xff]
    %v264 = vld [vmem:[#allocation2 + $0x650] sm:$0xff]
    %v265 = vld [vmem:[#allocation2 + $0x658] sm:$0xff]
    %v266 = vld [vmem:[#allocation2 + $0x660] sm:$0xff]
    %v267 = vld [vmem:[#allocation2 + $0x668] sm:$0xff]
    %v268 = vld [vmem:[#allocation2 + $0x670] sm:$0xff]
    %v269 = vld [vmem:[#allocation2 + $0x678] sm:$0xff]
    %v270 = vld [vmem:[#allocation2 + $0x680] sm:$0xff]
    %v271 = vld [vmem:[#allocation2 + $0x688] sm:$0xff]
    %v272 = vld [vmem:[#allocation2 + $0x690] sm:$0xff]
    %v273 = vld [vmem:[#allocation2 + $0x698] sm:$0xff]
    %v274 = vld [vmem:[#allocation2 + $0x6a0] sm:$0xff]
    %v275 = vld [vmem:[#allocation2 + $0x6a8] sm:$0xff]
    %v276 = vld [vmem:[#allocation2 + $0x6b0] sm:$0xff]
    %v277 = vld [vmem:[#allocation2 + $0x6b8] sm:$0xff]
    %v278 = vld [vmem:[#allocation2 + $0x6c0] sm:$0xff]
    %v279 = vld [vmem:[#allocation2 + $0x6c8] sm:$0xff]
    %v280 = vld [vmem:[#allocation2 + $0x6d0] sm:$0xff]
    %v281 = vld [vmem:[#allocation2 + $0x6d8] sm:$0xff]
    %v282 = vld [vmem:[#allocation2 + $0x6e0] sm:$0xff]
    %v283 = vld [vmem:[#allocation2 + $0x6e8] sm:$0xff]
    %v284 = vld [vmem:[#allocation2 + $0x6f0] sm:$0xff]
    %v285 = vld [vmem:[#allocation2 + $0x6f8] sm:$0xff]
    %v286 = vld [vmem:[#allocation2 + $0x700] sm:$0xff]
    %v287 = vld [vmem:[#allocation2 + $0x708] sm:$0xff]
    %v288 = vld [vmem:[#allocation2 + $0x710] sm:$0xff]
    %v289 = vld [vmem:[#allocation2 + $0x718] sm:$0xff]
    %v290 = vld [vmem:[#allocation2 + $0x720] sm:$0xff]
    %v291 = vld [vmem:[#allocation2 + $0x728] sm:$0xff]
    %v292 = vld [vmem:[#allocation2 + $0x730] sm:$0xff]
    %v293 = vld [vmem:[#allocation2 + $0x738] sm:$0xff]
    %v294 = vld [vmem:[#allocation2 + $0x740] sm:$0xff]
    %v295 = vld [vmem:[#allocation2 + $0x748] sm:$0xff]
    %v296 = vld [vmem:[#allocation2 + $0x750] sm:$0xff]
    %v297 = vld [vmem:[#allocation2 + $0x758] sm:$0xff]
    %v298 = vld [vmem:[#allocation2 + $0x760] sm:$0xff]
    %v299 = vld [vmem:[#allocation2 + $0x768] sm:$0xff]
    %v300 = vld [vmem:[#allocation2 + $0x770] sm:$0xff]
    %v301 = vld [vmem:[#allocation2 + $0x778] sm:$0xff]
    %v302 = vld [vmem:[#allocation2 + $0x780] sm:$0xff]
    %v303 = vld [vmem:[#allocation2 + $0x788] sm:$0xff]
    %v304 = vld [vmem:[#allocation2 + $0x790] sm:$0xff]
    %v305 = vld [vmem:[#allocation2 + $0x798] sm:$0xff]
    %v306 = vld [vmem:[#allocation2 + $0x7a0] sm:$0xff]
    %v307 = vld [vmem:[#allocation2 + $0x7a8] sm:$0xff]
    %v308 = vld [vmem:[#allocation2 + $0x7b0] sm:$0xff]
    %v309 = vld [vmem:[#allocation2 + $0x7b8] sm:$0xff]
    %v310 = vld [vmem:[#allocation2 + $0x7c0] sm:$0xff]
    %v311 = vld [vmem:[#allocation2 + $0x7c8] sm:$0xff]
    %v312 = vld [vmem:[#allocation2 + $0x7d0] sm:$0xff]
    %v313 = vld [vmem:[#allocation2 + $0x7d8] sm:$0xff]
    %v314 = vld [vmem:[#allocation2 + $0x7e0] sm:$0xff]
    %v315 = vld [vmem:[#allocation2 + $0x7e8] sm:$0xff]
    %v316 = vld [vmem:[#allocation2 + $0x7f0] sm:$0xff]
    %v317 = vld [vmem:[#allocation2 + $0x7f8] sm:$0xff]
    %v318 = vadd.f32 %v62, %v63
    %319 = vadd.xlane.f32.xlu0 %v318
    %v320 = vpop.xlane.xlu0 %319
    %v321 = vadd.f32 %v64, %v65
    %322 = vadd.xlane.f32.xlu0 %v321
    %v323 = vpop.xlane.xlu0 %322
    %v324 = vadd.f32 %v66, %v67
    %325 = vadd.xlane.f32.xlu0 %v324
    %v326 = vpop.xlane.xlu0 %325
    %v327 = vadd.f32 %v68, %v69
    %328 = vadd.xlane.f32.xlu0 %v327
    %v329 = vpop.xlane.xlu0 %328
    %v330 = vadd.f32 %v70, %v71
    %331 = vadd.xlane.f32.xlu0 %v330
    %v332 = vpop.xlane.xlu0 %331
    %v333 = vadd.f32 %v72, %v73
    %334 = vadd.xlane.f32.xlu0 %v333
    %v335 = vpop.xlane.xlu0 %334
    %v336 = vadd.f32 %v74, %v75
    %337 = vadd.xlane.f32.xlu0 %v336
    %v338 = vpop.xlane.xlu0 %337
    %v339 = vadd.f32 %v76, %v77
    %340 = vadd.xlane.f32.xlu0 %v339
    %v341 = vpop.xlane.xlu0 %340
    %v342 = vadd.f32 %v78, %v79
    %343 = vadd.xlane.f32.xlu0 %v342
    %v344 = vpop.xlane.xlu0 %343
    %v345 = vadd.f32 %v80, %v81
    %346 = vadd.xlane.f32.xlu0 %v345
    %v347 = vpop.xlane.xlu0 %346
    %v348 = vadd.f32 %v82, %v83
    %349 = vadd.xlane.f32.xlu0 %v348
    %v350 = vpop.xlane.xlu0 %349
    %v351 = vadd.f32 %v84, %v85
    %352 = vadd.xlane.f32.xlu0 %v351
    %v353 = vpop.xlane.xlu0 %352
    %v354 = vadd.f32 %v86, %v87
    %355 = vadd.xlane.f32.xlu0 %v354
    %v356 = vpop.xlane.xlu0 %355
    %v357 = vadd.f32 %v88, %v89
    %358 = vadd.xlane.f32.xlu0 %v357
    %v359 = vpop.xlane.xlu0 %358
    %v360 = vadd.f32 %v90, %v91
    %361 = vadd.xlane.f32.xlu0 %v360
    %v362 = vpop.xlane.xlu0 %361
    %v363 = vadd.f32 %v92, %v93
    %364 = vadd.xlane.f32.xlu0 %v363
    %v365 = vpop.xlane.xlu0 %364
    %v366 = vadd.f32 %v94, %v95
    %367 = vadd.xlane.f32.xlu0 %v366
    %v368 = vpop.xlane.xlu0 %367
    %v369 = vadd.f32 %v96, %v97
    %370 = vadd.xlane.f32.xlu0 %v369
    %v371 = vpop.xlane.xlu0 %370
    %v372 = vadd.f32 %v98, %v99
    %373 = vadd.xlane.f32.xlu0 %v372
    %v374 = vpop.xlane.xlu0 %373
    %v375 = vadd.f32 %v100, %v101
    %376 = vadd.xlane.f32.xlu0 %v375
    %v377 = vpop.xlane.xlu0 %376
    %v378 = vadd.f32 %v102, %v103
    %379 = vadd.xlane.f32.xlu0 %v378
    %v380 = vpop.xlane.xlu0 %379
    %v381 = vadd.f32 %v104, %v105
    %382 = vadd.xlane.f32.xlu0 %v381
    %v383 = vpop.xlane.xlu0 %382
    %v384 = vadd.f32 %v106, %v107
    %385 = vadd.xlane.f32.xlu0 %v384
    %v386 = vpop.xlane.xlu0 %385
    %v387 = vadd.f32 %v108, %v109
    %388 = vadd.xlane.f32.xlu0 %v387
    %v389 = vpop.xlane.xlu0 %388
    %v390 = vadd.f32 %v110, %v111
    %391 = vadd.xlane.f32.xlu0 %v390
    %v392 = vpop.xlane.xlu0 %391
    %v393 = vadd.f32 %v112, %v113
    %394 = vadd.xlane.f32.xlu0 %v393
    %v395 = vpop.xlane.xlu0 %394
    %v396 = vadd.f32 %v114, %v115
    %397 = vadd.xlane.f32.xlu0 %v396
    %v398 = vpop.xlane.xlu0 %397
    %v399 = vadd.f32 %v116, %v117
    %400 = vadd.xlane.f32.xlu0 %v399
    %v401 = vpop.xlane.xlu0 %400
    %v402 = vadd.f32 %v118, %v119
    %403 = vadd.xlane.f32.xlu0 %v402
    %v404 = vpop.xlane.xlu0 %403
    %v405 = vadd.f32 %v120, %v121
    %406 = vadd.xlane.f32.xlu0 %v405
    %v407 = vpop.xlane.xlu0 %406
    %v408 = vadd.f32 %v122, %v123
    %409 = vadd.xlane.f32.xlu0 %v408
    %v410 = vpop.xlane.xlu0 %409
    %v411 = vadd.f32 %v124, %v125
    %412 = vadd.xlane.f32.xlu0 %v411
    %v413 = vpop.xlane.xlu0 %412
    %v414 = vadd.f32 %v126, %v127
    %415 = vadd.xlane.f32.xlu0 %v414
    %v416 = vpop.xlane.xlu0 %415
    %v417 = vadd.f32 %v128, %v129
    %418 = vadd.xlane.f32.xlu0 %v417
    %v419 = vpop.xlane.xlu0 %418
    %v420 = vadd.f32 %v130, %v131
    %421 = vadd.xlane.f32.xlu0 %v420
    %v422 = vpop.xlane.xlu0 %421
    %v423 = vadd.f32 %v132, %v133
    %424 = vadd.xlane.f32.xlu0 %v423
    %v425 = vpop.xlane.xlu0 %424
    %v426 = vadd.f32 %v134, %v135
    %427 = vadd.xlane.f32.xlu0 %v426
    %v428 = vpop.xlane.xlu0 %427
    %v429 = vadd.f32 %v136, %v137
    %430 = vadd.xlane.f32.xlu0 %v429
    %v431 = vpop.xlane.xlu0 %430
    %v432 = vadd.f32 %v138, %v139
    %433 = vadd.xlane.f32.xlu0 %v432
    %v434 = vpop.xlane.xlu0 %433
    %v435 = vadd.f32 %v140, %v141
    %436 = vadd.xlane.f32.xlu0 %v435
    %v437 = vpop.xlane.xlu0 %436
    %v438 = vadd.f32 %v142, %v143
    %439 = vadd.xlane.f32.xlu0 %v438
    %v440 = vpop.xlane.xlu0 %439
    %v441 = vadd.f32 %v144, %v145
    %442 = vadd.xlane.f32.xlu0 %v441
    %v443 = vpop.xlane.xlu0 %442
    %v444 = vadd.f32 %v146, %v147
    %445 = vadd.xlane.f32.xlu0 %v444
    %v446 = vpop.xlane.xlu0 %445
    %v447 = vadd.f32 %v148, %v149
    %448 = vadd.xlane.f32.xlu0 %v447
    %v449 = vpop.xlane.xlu0 %448
    %v450 = vadd.f32 %v150, %v151
    %451 = vadd.xlane.f32.xlu0 %v450
    %v452 = vpop.xlane.xlu0 %451
    %v453 = vadd.f32 %v152, %v153
    %454 = vadd.xlane.f32.xlu0 %v453
    %v455 = vpop.xlane.xlu0 %454
    %v456 = vadd.f32 %v154, %v155
    %457 = vadd.xlane.f32.xlu0 %v456
    %v458 = vpop.xlane.xlu0 %457
    %v459 = vadd.f32 %v156, %v157
    %460 = vadd.xlane.f32.xlu0 %v459
    %v461 = vpop.xlane.xlu0 %460
    %v462 = vadd.f32 %v158, %v159
    %463 = vadd.xlane.f32.xlu0 %v462
    %v464 = vpop.xlane.xlu0 %463
    %v465 = vadd.f32 %v160, %v161
    %466 = vadd.xlane.f32.xlu0 %v465
    %v467 = vpop.xlane.xlu0 %466
    %v468 = vadd.f32 %v162, %v163
    %469 = vadd.xlane.f32.xlu0 %v468
    %v470 = vpop.xlane.xlu0 %469
    %v471 = vadd.f32 %v164, %v165
    %472 = vadd.xlane.f32.xlu0 %v471
    %v473 = vpop.xlane.xlu0 %472
    %v474 = vadd.f32 %v166, %v167
    %475 = vadd.xlane.f32.xlu0 %v474
    %v476 = vpop.xlane.xlu0 %475
    %v477 = vadd.f32 %v168, %v169
    %478 = vadd.xlane.f32.xlu0 %v477
    %v479 = vpop.xlane.xlu0 %478
    %v480 = vadd.f32 %v170, %v171
    %481 = vadd.xlane.f32.xlu0 %v480
    %v482 = vpop.xlane.xlu0 %481
    %v483 = vadd.f32 %v172, %v173
    %484 = vadd.xlane.f32.xlu0 %v483
    %v485 = vpop.xlane.xlu0 %484
    %v486 = vadd.f32 %v174, %v175
    %487 = vadd.xlane.f32.xlu0 %v486
    %v488 = vpop.xlane.xlu0 %487
    %v489 = vadd.f32 %v176, %v177
    %490 = vadd.xlane.f32.xlu0 %v489
    %v491 = vpop.xlane.xlu0 %490
    %v492 = vadd.f32 %v178, %v179
    %493 = vadd.xlane.f32.xlu0 %v492
    %v494 = vpop.xlane.xlu0 %493
    %v495 = vadd.f32 %v180, %v181
    %496 = vadd.xlane.f32.xlu0 %v495
    %v497 = vpop.xlane.xlu0 %496
    %v498 = vadd.f32 %v182, %v183
    %499 = vadd.xlane.f32.xlu0 %v498
    %v500 = vpop.xlane.xlu0 %499
    %v501 = vadd.f32 %v184, %v185
    %502 = vadd.xlane.f32.xlu0 %v501
    %v503 = vpop.xlane.xlu0 %502
    %v504 = vadd.f32 %v186, %v187
    %505 = vadd.xlane.f32.xlu0 %v504
    %v506 = vpop.xlane.xlu0 %505
    %v507 = vadd.f32 %v188, %v189
    %508 = vadd.xlane.f32.xlu0 %v507
    %v509 = vpop.xlane.xlu0 %508
    %v510 = vadd.f32 %v190, %v191
    %511 = vadd.xlane.f32.xlu0 %v510
    %v512 = vpop.xlane.xlu0 %511
    %v513 = vadd.f32 %v192, %v193
    %514 = vadd.xlane.f32.xlu0 %v513
    %v515 = vpop.xlane.xlu0 %514
    %v516 = vadd.f32 %v194, %v195
    %517 = vadd.xlane.f32.xlu0 %v516
    %v518 = vpop.xlane.xlu0 %517
    %v519 = vadd.f32 %v196, %v197
    %520 = vadd.xlane.f32.xlu0 %v519
    %v521 = vpop.xlane.xlu0 %520
    %v522 = vadd.f32 %v198, %v199
    %523 = vadd.xlane.f32.xlu0 %v522
    %v524 = vpop.xlane.xlu0 %523
    %v525 = vadd.f32 %v200, %v201
    %526 = vadd.xlane.f32.xlu0 %v525
    %v527 = vpop.xlane.xlu0 %526
    %v528 = vadd.f32 %v202, %v203
    %529 = vadd.xlane.f32.xlu0 %v528
    %v530 = vpop.xlane.xlu0 %529
    %v531 = vadd.f32 %v204, %v205
    %532 = vadd.xlane.f32.xlu0 %v531
    %v533 = vpop.xlane.xlu0 %532
    %v534 = vadd.f32 %v206, %v207
    %535 = vadd.xlane.f32.xlu0 %v534
    %v536 = vpop.xlane.xlu0 %535
    %v537 = vadd.f32 %v208, %v209
    %538 = vadd.xlane.f32.xlu0 %v537
    %v539 = vpop.xlane.xlu0 %538
    %v540 = vadd.f32 %v210, %v211
    %541 = vadd.xlane.f32.xlu0 %v540
    %v542 = vpop.xlane.xlu0 %541
    %v543 = vadd.f32 %v212, %v213
    %544 = vadd.xlane.f32.xlu0 %v543
    %v545 = vpop.xlane.xlu0 %544
    %v546 = vadd.f32 %v214, %v215
    %547 = vadd.xlane.f32.xlu0 %v546
    %v548 = vpop.xlane.xlu0 %547
    %v549 = vadd.f32 %v216, %v217
    %550 = vadd.xlane.f32.xlu0 %v549
    %v551 = vpop.xlane.xlu0 %550
    %v552 = vadd.f32 %v218, %v219
    %553 = vadd.xlane.f32.xlu0 %v552
    %v554 = vpop.xlane.xlu0 %553
    %v555 = vadd.f32 %v220, %v221
    %556 = vadd.xlane.f32.xlu0 %v555
    %v557 = vpop.xlane.xlu0 %556
    %v558 = vadd.f32 %v222, %v223
    %559 = vadd.xlane.f32.xlu0 %v558
    %v560 = vpop.xlane.xlu0 %559
    %v561 = vadd.f32 %v224, %v225
    %562 = vadd.xlane.f32.xlu0 %v561
    %v563 = vpop.xlane.xlu0 %562
    %v564 = vadd.f32 %v226, %v227
    %565 = vadd.xlane.f32.xlu0 %v564
    %v566 = vpop.xlane.xlu0 %565
    %v567 = vadd.f32 %v228, %v229
    %568 = vadd.xlane.f32.xlu0 %v567
    %v569 = vpop.xlane.xlu0 %568
    %v570 = vadd.f32 %v230, %v231
    %571 = vadd.xlane.f32.xlu0 %v570
    %v572 = vpop.xlane.xlu0 %571
    %v573 = vadd.f32 %v232, %v233
    %574 = vadd.xlane.f32.xlu0 %v573
    %v575 = vpop.xlane.xlu0 %574
    %v576 = vadd.f32 %v234, %v235
    %577 = vadd.xlane.f32.xlu0 %v576
    %v578 = vpop.xlane.xlu0 %577
    %v579 = vadd.f32 %v236, %v237
    %580 = vadd.xlane.f32.xlu0 %v579
    %v581 = vpop.xlane.xlu0 %580
    %v582 = vadd.f32 %v238, %v239
    %583 = vadd.xlane.f32.xlu0 %v582
    %v584 = vpop.xlane.xlu0 %583
    %v585 = vadd.f32 %v240, %v241
    %586 = vadd.xlane.f32.xlu0 %v585
    %v587 = vpop.xlane.xlu0 %586
    %v588 = vadd.f32 %v242, %v243
    %589 = vadd.xlane.f32.xlu0 %v588
    %v590 = vpop.xlane.xlu0 %589
    %v591 = vadd.f32 %v244, %v245
    %592 = vadd.xlane.f32.xlu0 %v591
    %v593 = vpop.xlane.xlu0 %592
    %v594 = vadd.f32 %v246, %v247
    %595 = vadd.xlane.f32.xlu0 %v594
    %v596 = vpop.xlane.xlu0 %595
    %v597 = vadd.f32 %v248, %v249
    %598 = vadd.xlane.f32.xlu0 %v597
    %v599 = vpop.xlane.xlu0 %598
    %v600 = vadd.f32 %v250, %v251
    %601 = vadd.xlane.f32.xlu0 %v600
    %v602 = vpop.xlane.xlu0 %601
    %v603 = vadd.f32 %v252, %v253
    %604 = vadd.xlane.f32.xlu0 %v603
    %v605 = vpop.xlane.xlu0 %604
    %v606 = vadd.f32 %v254, %v255
    %607 = vadd.xlane.f32.xlu0 %v606
    %v608 = vpop.xlane.xlu0 %607
    %v609 = vadd.f32 %v256, %v257
    %610 = vadd.xlane.f32.xlu0 %v609
    %v611 = vpop.xlane.xlu0 %610
    %v612 = vadd.f32 %v258, %v259
    %613 = vadd.xlane.f32.xlu0 %v612
    %v614 = vpop.xlane.xlu0 %613
    %v615 = vadd.f32 %v260, %v261
    %616 = vadd.xlane.f32.xlu0 %v615
    %v617 = vpop.xlane.xlu0 %616
    %v618 = vadd.f32 %v262, %v263
    %619 = vadd.xlane.f32.xlu0 %v618
    %v620 = vpop.xlane.xlu0 %619
    %v621 = vadd.f32 %v264, %v265
    %622 = vadd.xlane.f32.xlu0 %v621
    %v623 = vpop.xlane.xlu0 %622
    %v624 = vadd.f32 %v266, %v267
    %625 = vadd.xlane.f32.xlu0 %v624
    %v626 = vpop.xlane.xlu0 %625
    %v627 = vadd.f32 %v268, %v269
    %628 = vadd.xlane.f32.xlu0 %v627
    %v629 = vpop.xlane.xlu0 %628
    %v630 = vadd.f32 %v270, %v271
    %631 = vadd.xlane.f32.xlu0 %v630
    %v632 = vpop.xlane.xlu0 %631
    %v633 = vadd.f32 %v272, %v273
    %634 = vadd.xlane.f32.xlu0 %v633
    %v635 = vpop.xlane.xlu0 %634
    %v636 = vadd.f32 %v274, %v275
    %637 = vadd.xlane.f32.xlu0 %v636
    %v638 = vpop.xlane.xlu0 %637
    %v639 = vadd.f32 %v276, %v277
    %640 = vadd.xlane.f32.xlu0 %v639
    %v641 = vpop.xlane.xlu0 %640
    %v642 = vadd.f32 %v278, %v279
    %643 = vadd.xlane.f32.xlu0 %v642
    %v644 = vpop.xlane.xlu0 %643
    %v645 = vadd.f32 %v280, %v281
    %646 = vadd.xlane.f32.xlu0 %v645
    %v647 = vpop.xlane.xlu0 %646
    %v648 = vadd.f32 %v282, %v283
    %649 = vadd.xlane.f32.xlu0 %v648
    %v650 = vpop.xlane.xlu0 %649
    %v651 = vadd.f32 %v284, %v285
    %652 = vadd.xlane.f32.xlu0 %v651
    %v653 = vpop.xlane.xlu0 %652
    %v654 = vadd.f32 %v286, %v287
    %655 = vadd.xlane.f32.xlu0 %v654
    %v656 = vpop.xlane.xlu0 %655
    %v657 = vadd.f32 %v288, %v289
    %658 = vadd.xlane.f32.xlu0 %v657
    %v659 = vpop.xlane.xlu0 %658
    %v660 = vadd.f32 %v290, %v291
    %661 = vadd.xlane.f32.xlu0 %v660
    %v662 = vpop.xlane.xlu0 %661
    %v663 = vadd.f32 %v292, %v293
    %664 = vadd.xlane.f32.xlu0 %v663
    %v665 = vpop.xlane.xlu0 %664
    %v666 = vadd.f32 %v294, %v295
    %667 = vadd.xlane.f32.xlu0 %v666
    %v668 = vpop.xlane.xlu0 %667
    %v669 = vadd.f32 %v296, %v297
    %670 = vadd.xlane.f32.xlu0 %v669
    %v671 = vpop.xlane.xlu0 %670
    %v672 = vadd.f32 %v298, %v299
    %673 = vadd.xlane.f32.xlu0 %v672
    %v674 = vpop.xlane.xlu0 %673
    %v675 = vadd.f32 %v300, %v301
    %676 = vadd.xlane.f32.xlu0 %v675
    %v677 = vpop.xlane.xlu0 %676
    %v678 = vadd.f32 %v302, %v303
    %679 = vadd.xlane.f32.xlu0 %v678
    %v680 = vpop.xlane.xlu0 %679
    %v681 = vadd.f32 %v304, %v305
    %682 = vadd.xlane.f32.xlu0 %v681
    %v683 = vpop.xlane.xlu0 %682
    %v684 = vadd.f32 %v306, %v307
    %685 = vadd.xlane.f32.xlu0 %v684
    %v686 = vpop.xlane.xlu0 %685
    %v687 = vadd.f32 %v308, %v309
    %688 = vadd.xlane.f32.xlu0 %v687
    %v689 = vpop.xlane.xlu0 %688
    %v690 = vadd.f32 %v310, %v311
    %691 = vadd.xlane.f32.xlu0 %v690
    %v692 = vpop.xlane.xlu0 %691
    %v693 = vadd.f32 %v312, %v313
    %694 = vadd.xlane.f32.xlu0 %v693
    %v695 = vpop.xlane.xlu0 %694
    %v696 = vadd.f32 %v314, %v315
    %697 = vadd.xlane.f32.xlu0 %v696
    %v698 = vpop.xlane.xlu0 %697
    %v699 = vadd.f32 %v316, %v317
    %700 = vadd.xlane.f32.xlu0 %v699
    %v701 = vpop.xlane.xlu0 %700
    %v702 = vmul.f32 %v320, 0.00390625
    %v703 = vmul.f32 %v323, 0.00390625
    %v704 = vmul.f32 %v326, 0.00390625
    %v705 = vmul.f32 %v329, 0.00390625
    %v706 = vmul.f32 %v332, 0.00390625
    %v707 = vmul.f32 %v335, 0.00390625
    %v708 = vmul.f32 %v338, 0.00390625
    %v709 = vmul.f32 %v341, 0.00390625
    %v710 = vmul.f32 %v344, 0.00390625
    %v711 = vmul.f32 %v347, 0.00390625
    %v712 = vmul.f32 %v350, 0.00390625
    %v713 = vmul.f32 %v353, 0.00390625
    %v714 = vmul.f32 %v356, 0.00390625
    %v715 = vmul.f32 %v359, 0.00390625
    %v716 = vmul.f32 %v362, 0.00390625
    %v717 = vmul.f32 %v365, 0.00390625
    %v718 = vmul.f32 %v368, 0.00390625
    %v719 = vmul.f32 %v371, 0.00390625
    %v720 = vmul.f32 %v374, 0.00390625
    %v721 = vmul.f32 %v377, 0.00390625
    %v722 = vmul.f32 %v380, 0.00390625
    %v723 = vmul.f32 %v383, 0.00390625
    %v724 = vmul.f32 %v386, 0.00390625
    %v725 = vmul.f32 %v389, 0.00390625
    %v726 = vmul.f32 %v392, 0.00390625
    %v727 = vmul.f32 %v395, 0.00390625
    %v728 = vmul.f32 %v398, 0.00390625
    %v729 = vmul.f32 %v401, 0.00390625
    %v730 = vmul.f32 %v404, 0.00390625
    %v731 = vmul.f32 %v407, 0.00390625
    %v732 = vmul.f32 %v410, 0.00390625
    %v733 = vmul.f32 %v413, 0.00390625
    %v734 = vmul.f32 %v416, 0.00390625
    %v735 = vmul.f32 %v419, 0.00390625
    %v736 = vmul.f32 %v422, 0.00390625
    %v737 = vmul.f32 %v425, 0.00390625
    %v738 = vmul.f32 %v428, 0.00390625
    %v739 = vmul.f32 %v431, 0.00390625
    %v740 = vmul.f32 %v434, 0.00390625
    %v741 = vmul.f32 %v437, 0.00390625
    %v742 = vmul.f32 %v440, 0.00390625
    %v743 = vmul.f32 %v443, 0.00390625
    %v744 = vmul.f32 %v446, 0.00390625
    %v745 = vmul.f32 %v449, 0.00390625
    %v746 = vmul.f32 %v452, 0.00390625
    %v747 = vmul.f32 %v455, 0.00390625
    %v748 = vmul.f32 %v458, 0.00390625
    %v749 = vmul.f32 %v461, 0.00390625
    %v750 = vmul.f32 %v464, 0.00390625
    %v751 = vmul.f32 %v467, 0.00390625
    %v752 = vmul.f32 %v470, 0.00390625
    %v753 = vmul.f32 %v473, 0.00390625
    %v754 = vmul.f32 %v476, 0.00390625
    %v755 = vmul.f32 %v479, 0.00390625
    %v756 = vmul.f32 %v482, 0.00390625
    %v757 = vmul.f32 %v485, 0.00390625
    %v758 = vmul.f32 %v488, 0.00390625
    %v759 = vmul.f32 %v491, 0.00390625
    %v760 = vmul.f32 %v494, 0.00390625
    %v761 = vmul.f32 %v497, 0.00390625
    %v762 = vmul.f32 %v500, 0.00390625
    %v763 = vmul.f32 %v503, 0.00390625
    %v764 = vmul.f32 %v506, 0.00390625
    %v765 = vmul.f32 %v509, 0.00390625
    %v766 = vmul.f32 %v512, 0.00390625
    %v767 = vmul.f32 %v515, 0.00390625
    %v768 = vmul.f32 %v518, 0.00390625
    %v769 = vmul.f32 %v521, 0.00390625
    %v770 = vmul.f32 %v524, 0.00390625
    %v771 = vmul.f32 %v527, 0.00390625
    %v772 = vmul.f32 %v530, 0.00390625
    %v773 = vmul.f32 %v533, 0.00390625
    %v774 = vmul.f32 %v536, 0.00390625
    %v775 = vmul.f32 %v539, 0.00390625
    %v776 = vmul.f32 %v542, 0.00390625
    %v777 = vmul.f32 %v545, 0.00390625
    %v778 = vmul.f32 %v548, 0.00390625
    %v779 = vmul.f32 %v551, 0.00390625
    %v780 = vmul.f32 %v554, 0.00390625
    %v781 = vmul.f32 %v557, 0.00390625
    %v782 = vmul.f32 %v560, 0.00390625
    %v783 = vmul.f32 %v563, 0.00390625
    %v784 = vmul.f32 %v566, 0.00390625
    %v785 = vmul.f32 %v569, 0.00390625
    %v786 = vmul.f32 %v572, 0.00390625
    %v787 = vmul.f32 %v575, 0.00390625
    %v788 = vmul.f32 %v578, 0.00390625
    %v789 = vmul.f32 %v581, 0.00390625
    %v790 = vmul.f32 %v584, 0.00390625
    %v791 = vmul.f32 %v587, 0.00390625
    %v792 = vmul.f32 %v590, 0.00390625
    %v793 = vmul.f32 %v593, 0.00390625
    %v794 = vmul.f32 %v596, 0.00390625
    %v795 = vmul.f32 %v599, 0.00390625
    %v796 = vmul.f32 %v602, 0.00390625
    %v797 = vmul.f32 %v605, 0.00390625
    %v798 = vmul.f32 %v608, 0.00390625
    %v799 = vmul.f32 %v611, 0.00390625
    %v800 = vmul.f32 %v614, 0.00390625
    %v801 = vmul.f32 %v617, 0.00390625
    %v802 = vmul.f32 %v620, 0.00390625
    %v803 = vmul.f32 %v623, 0.00390625
    %v804 = vmul.f32 %v626, 0.00390625
    %v805 = vmul.f32 %v629, 0.00390625
    %v806 = vmul.f32 %v632, 0.00390625
    %v807 = vmul.f32 %v635, 0.00390625
    %v808 = vmul.f32 %v638, 0.00390625
    %v809 = vmul.f32 %v641, 0.00390625
    %v810 = vmul.f32 %v644, 0.00390625
    %v811 = vmul.f32 %v647, 0.00390625
    %v812 = vmul.f32 %v650, 0.00390625
    %v813 = vmul.f32 %v653, 0.00390625
    %v814 = vmul.f32 %v656, 0.00390625
    %v815 = vmul.f32 %v659, 0.00390625
    %v816 = vmul.f32 %v662, 0.00390625
    %v817 = vmul.f32 %v665, 0.00390625
    %v818 = vmul.f32 %v668, 0.00390625
    %v819 = vmul.f32 %v671, 0.00390625
    %v820 = vmul.f32 %v674, 0.00390625
    %v821 = vmul.f32 %v677, 0.00390625
    %v822 = vmul.f32 %v680, 0.00390625
    %v823 = vmul.f32 %v683, 0.00390625
    %v824 = vmul.f32 %v686, 0.00390625
    %v825 = vmul.f32 %v689, 0.00390625
    %v826 = vmul.f32 %v692, 0.00390625
    %v827 = vmul.f32 %v695, 0.00390625
    %v828 = vmul.f32 %v698, 0.00390625
    %v829 = vmul.f32 %v701, 0.00390625
    %v830 = vld [vmem:[#allocation5] sm:$0xff]
    %v831 = vld [vmem:[#allocation5 + $0x8] sm:$0xff]
    %v832 = vld [vmem:[#allocation5 + $0x10] sm:$0xff]
    %v833 = vld [vmem:[#allocation5 + $0x18] sm:$0xff]
    %v834 = vld [vmem:[%s2] sm:$0x1]
    %v836 = vlaneseq
    %v837 = vshrl.u32 %v836, 7
    %v838 = vsub.s32 0, %v837
    %v839 = vrot.slane %v834, %v838
    %v969 = vlaneseq
    %v970 = vand.u32 %v969, 127
    %v971 = vlaneseq
    %v972 = vshrl.u32 %v971, 7
    %v973 = vsub.s32 %v970, %v972
    %v974 = vrot.slane %v702, %v973
    %v975 = vadd.s32 %v970, 4294967288
    %v976 = vlaneseq
    %v977 = vshrl.u32 %v976, 7
    %v978 = vsub.s32 %v975, %v977
    %v979 = vrot.slane %v703, %v978
    %vm980 = vcmask 130112
    %v981 = vsel %vm980, %v979, %v974
    %v982 = vadd.s32 %v970, 4294967280
    %v983 = vlaneseq
    %v984 = vshrl.u32 %v983, 7
    %v985 = vsub.s32 %v982, %v984
    %v986 = vrot.slane %v704, %v985
    %vm987 = vcmask 195712
    %v988 = vsel %vm987, %v986, %v981
    %v989 = vadd.s32 %v970, 4294967272
    %v990 = vlaneseq
    %v991 = vshrl.u32 %v990, 7
    %v992 = vsub.s32 %v989, %v991
    %v993 = vrot.slane %v705, %v992
    %vm994 = vcmask 261312
    %v995 = vsel %vm994, %v993, %v988
    %v996 = vadd.s32 %v970, 4294967264
    %v997 = vlaneseq
    %v998 = vshrl.u32 %v997, 7
    %v999 = vsub.s32 %v996, %v998
    %v1000 = vrot.slane %v706, %v999
    %vm1001 = vcmask 326912
    %v1002 = vsel %vm1001, %v1000, %v995
    %v1003 = vadd.s32 %v970, 4294967256
    %v1004 = vlaneseq
    %v1005 = vshrl.u32 %v1004, 7
    %v1006 = vsub.s32 %v1003, %v1005
    %v1007 = vrot.slane %v707, %v1006
    %vm1008 = vcmask 392512
    %v1009 = vsel %vm1008, %v1007, %v1002
    %v1010 = vadd.s32 %v970, 4294967248
    %v1011 = vlaneseq
    %v1012 = vshrl.u32 %v1011, 7
    %v1013 = vsub.s32 %v1010, %v1012
    %v1014 = vrot.slane %v708, %v1013
    %vm1015 = vcmask 458112
    %v1016 = vsel %vm1015, %v1014, %v1009
    %v1017 = vadd.s32 %v970, 4294967240
    %v1018 = vlaneseq
    %v1019 = vshrl.u32 %v1018, 7
    %v1020 = vsub.s32 %v1017, %v1019
    %v1021 = vrot.slane %v709, %v1020
    %vm1022 = vcmask 523712
    %v1023 = vsel %vm1022, %v1021, %v1016
    %v1024 = vadd.s32 %v970, 4294967232
    %v1025 = vlaneseq
    %v1026 = vshrl.u32 %v1025, 7
    %v1027 = vsub.s32 %v1024, %v1026
    %v1028 = vrot.slane %v710, %v1027
    %vm1029 = vcmask 589312
    %v1030 = vsel %vm1029, %v1028, %v1023
    %v1031 = vadd.s32 %v970, 4294967224
    %v1032 = vlaneseq
    %v1033 = vshrl.u32 %v1032, 7
    %v1034 = vsub.s32 %v1031, %v1033
    %v1035 = vrot.slane %v711, %v1034
    %vm1036 = vcmask 654912
    %v1037 = vsel %vm1036, %v1035, %v1030
    %v1038 = vadd.s32 %v970, 4294967216
    %v1039 = vlaneseq
    %v1040 = vshrl.u32 %v1039, 7
    %v1041 = vsub.s32 %v1038, %v1040
    %v1042 = vrot.slane %v712, %v1041
    %vm1043 = vcmask 720512
    %v1044 = vsel %vm1043, %v1042, %v1037
    %v1045 = vadd.s32 %v970, 4294967208
    %v1046 = vlaneseq
    %v1047 = vshrl.u32 %v1046, 7
    %v1048 = vsub.s32 %v1045, %v1047
    %v1049 = vrot.slane %v713, %v1048
    %vm1050 = vcmask 786112
    %v1051 = vsel %vm1050, %v1049, %v1044
    %v1052 = vadd.s32 %v970, 4294967200
    %v1053 = vlaneseq
    %v1054 = vshrl.u32 %v1053, 7
    %v1055 = vsub.s32 %v1052, %v1054
    %v1056 = vrot.slane %v714, %v1055
    %vm1057 = vcmask 851712
    %v1058 = vsel %vm1057, %v1056, %v1051
    %v1059 = vadd.s32 %v970, 4294967192
    %v1060 = vlaneseq
    %v1061 = vshrl.u32 %v1060, 7
    %v1062 = vsub.s32 %v1059, %v1061
    %v1063 = vrot.slane %v715, %v1062
    %vm1064 = vcmask 917312
    %v1065 = vsel %vm1064, %v1063, %v1058
    %v1066 = vadd.s32 %v970, 4294967184
    %v1067 = vlaneseq
    %v1068 = vshrl.u32 %v1067, 7
    %v1069 = vsub.s32 %v1066, %v1068
    %v1070 = vrot.slane %v716, %v1069
    %vm1071 = vcmask 982912
    %v1072 = vsel %vm1071, %v1070, %v1065
    %v1073 = vadd.s32 %v970, 4294967176
    %v1074 = vlaneseq
    %v1075 = vshrl.u32 %v1074, 7
    %v1076 = vsub.s32 %v1073, %v1075
    %v1077 = vrot.slane %v717, %v1076
    %vm1078 = vcmask 1048512
    %v1079 = vsel %vm1078, %v1077, %v1072
    %v1080 = vlaneseq
    %v1081 = vshrl.u32 %v1080, 7
    %v1082 = vsub.s32 %v970, %v1081
    %v1083 = vrot.slane %v718, %v1082
    %v1084 = vlaneseq
    %v1085 = vshrl.u32 %v1084, 7
    %v1086 = vsub.s32 %v975, %v1085
    %v1087 = vrot.slane %v719, %v1086
    %v1088 = vsel %vm980, %v1087, %v1083
    %v1089 = vlaneseq
    %v1090 = vshrl.u32 %v1089, 7
    %v1091 = vsub.s32 %v982, %v1090
    %v1092 = vrot.slane %v720, %v1091
    %v1093 = vsel %vm987, %v1092, %v1088
    %v1094 = vlaneseq
    %v1095 = vshrl.u32 %v1094, 7
    %v1096 = vsub.s32 %v989, %v1095
    %v1097 = vrot.slane %v721, %v1096
    %v1098 = vsel %vm994, %v1097, %v1093
    %v1099 = vlaneseq
    %v1100 = vshrl.u32 %v1099, 7
    %v1101 = vsub.s32 %v996, %v1100
    %v1102 = vrot.slane %v722, %v1101
    %v1103 = vsel %vm1001, %v1102, %v1098
    %v1104 = vlaneseq
    %v1105 = vshrl.u32 %v1104, 7
    %v1106 = vsub.s32 %v1003, %v1105
    %v1107 = vrot.slane %v723, %v1106
    %v1108 = vsel %vm1008, %v1107, %v1103
    %v1109 = vlaneseq
    %v1110 = vshrl.u32 %v1109, 7
    %v1111 = vsub.s32 %v1010, %v1110
    %v1112 = vrot.slane %v724, %v1111
    %v1113 = vsel %vm1015, %v1112, %v1108
    %v1114 = vlaneseq
    %v1115 = vshrl.u32 %v1114, 7
    %v1116 = vsub.s32 %v1017, %v1115
    %v1117 = vrot.slane %v725, %v1116
    %v1118 = vsel %vm1022, %v1117, %v1113
    %v1119 = vlaneseq
    %v1120 = vshrl.u32 %v1119, 7
    %v1121 = vsub.s32 %v1024, %v1120
    %v1122 = vrot.slane %v726, %v1121
    %v1123 = vsel %vm1029, %v1122, %v1118
    %v1124 = vlaneseq
    %v1125 = vshrl.u32 %v1124, 7
    %v1126 = vsub.s32 %v1031, %v1125
    %v1127 = vrot.slane %v727, %v1126
    %v1128 = vsel %vm1036, %v1127, %v1123
    %v1129 = vlaneseq
    %v1130 = vshrl.u32 %v1129, 7
    %v1131 = vsub.s32 %v1038, %v1130
    %v1132 = vrot.slane %v728, %v1131
    %v1133 = vsel %vm1043, %v1132, %v1128
    %v1134 = vlaneseq
    %v1135 = vshrl.u32 %v1134, 7
    %v1136 = vsub.s32 %v1045, %v1135
    %v1137 = vrot.slane %v729, %v1136
    %v1138 = vsel %vm1050, %v1137, %v1133
    %v1139 = vlaneseq
    %v1140 = vshrl.u32 %v1139, 7
    %v1141 = vsub.s32 %v1052, %v1140
    %v1142 = vrot.slane %v730, %v1141
    %v1143 = vsel %vm1057, %v1142, %v1138
    %v1144 = vlaneseq
    %v1145 = vshrl.u32 %v1144, 7
    %v1146 = vsub.s32 %v1059, %v1145
    %v1147 = vrot.slane %v731, %v1146
    %v1148 = vsel %vm1064, %v1147, %v1143
    %v1149 = vlaneseq
    %v1150 = vshrl.u32 %v1149, 7
    %v1151 = vsub.s32 %v1066, %v1150
    %v1152 = vrot.slane %v732, %v1151
    %v1153 = vsel %vm1071, %v1152, %v1148
    %v1154 = vlaneseq
    %v1155 = vshrl.u32 %v1154, 7
    %v1156 = vsub.s32 %v1073, %v1155
    %v1157 = vrot.slane %v733, %v1156
    %v1158 = vsel %vm1078, %v1157, %v1153
    %v1159 = vlaneseq
    %v1160 = vshrl.u32 %v1159, 7
    %v1161 = vsub.s32 %v970, %v1160
    %v1162 = vrot.slane %v734, %v1161
    %v1163 = vlaneseq
    %v1164 = vshrl.u32 %v1163, 7
    %v1165 = vsub.s32 %v975, %v1164
    %v1166 = vrot.slane %v735, %v1165
    %v1167 = vsel %vm980, %v1166, %v1162
    %v1168 = vlaneseq
    %v1169 = vshrl.u32 %v1168, 7
    %v1170 = vsub.s32 %v982, %v1169
    %v1171 = vrot.slane %v736, %v1170
    %v1172 = vsel %vm987, %v1171, %v1167
    %v1173 = vlaneseq
    %v1174 = vshrl.u32 %v1173, 7
    %v1175 = vsub.s32 %v989, %v1174
    %v1176 = vrot.slane %v737, %v1175
    %v1177 = vsel %vm994, %v1176, %v1172
    %v1178 = vlaneseq
    %v1179 = vshrl.u32 %v1178, 7
    %v1180 = vsub.s32 %v996, %v1179
    %v1181 = vrot.slane %v738, %v1180
    %v1182 = vsel %vm1001, %v1181, %v1177
    %v1183 = vlaneseq
    %v1184 = vshrl.u32 %v1183, 7
    %v1185 = vsub.s32 %v1003, %v1184
    %v1186 = vrot.slane %v739, %v1185
    %v1187 = vsel %vm1008, %v1186, %v1182
    %v1188 = vlaneseq
    %v1189 = vshrl.u32 %v1188, 7
    %v1190 = vsub.s32 %v1010, %v1189
    %v1191 = vrot.slane %v740, %v1190
    %v1192 = vsel %vm1015, %v1191, %v1187
    %v1193 = vlaneseq
    %v1194 = vshrl.u32 %v1193, 7
    %v1195 = vsub.s32 %v1017, %v1194
    %v1196 = vrot.slane %v741, %v1195
    %v1197 = vsel %vm1022, %v1196, %v1192
    %v1198 = vlaneseq
    %v1199 = vshrl.u32 %v1198, 7
    %v1200 = vsub.s32 %v1024, %v1199
    %v1201 = vrot.slane %v742, %v1200
    %v1202 = vsel %vm1029, %v1201, %v1197
    %v1203 = vlaneseq
    %v1204 = vshrl.u32 %v1203, 7
    %v1205 = vsub.s32 %v1031, %v1204
    %v1206 = vrot.slane %v743, %v1205
    %v1207 = vsel %vm1036, %v1206, %v1202
    %v1208 = vlaneseq
    %v1209 = vshrl.u32 %v1208, 7
    %v1210 = vsub.s32 %v1038, %v1209
    %v1211 = vrot.slane %v744, %v1210
    %v1212 = vsel %vm1043, %v1211, %v1207
    %v1213 = vlaneseq
    %v1214 = vshrl.u32 %v1213, 7
    %v1215 = vsub.s32 %v1045, %v1214
    %v1216 = vrot.slane %v745, %v1215
    %v1217 = vsel %vm1050, %v1216, %v1212
    %v1218 = vlaneseq
    %v1219 = vshrl.u32 %v1218, 7
    %v1220 = vsub.s32 %v1052, %v1219
    %v1221 = vrot.slane %v746, %v1220
    %v1222 = vsel %vm1057, %v1221, %v1217
    %v1223 = vlaneseq
    %v1224 = vshrl.u32 %v1223, 7
    %v1225 = vsub.s32 %v1059, %v1224
    %v1226 = vrot.slane %v747, %v1225
    %v1227 = vsel %vm1064, %v1226, %v1222
    %v1228 = vlaneseq
    %v1229 = vshrl.u32 %v1228, 7
    %v1230 = vsub.s32 %v1066, %v1229
    %v1231 = vrot.slane %v748, %v1230
    %v1232 = vsel %vm1071, %v1231, %v1227
    %v1233 = vlaneseq
    %v1234 = vshrl.u32 %v1233, 7
    %v1235 = vsub.s32 %v1073, %v1234
    %v1236 = vrot.slane %v749, %v1235
    %v1237 = vsel %vm1078, %v1236, %v1232
    %v1238 = vlaneseq
    %v1239 = vshrl.u32 %v1238, 7
    %v1240 = vsub.s32 %v970, %v1239
    %v1241 = vrot.slane %v750, %v1240
    %v1242 = vlaneseq
    %v1243 = vshrl.u32 %v1242, 7
    %v1244 = vsub.s32 %v975, %v1243
    %v1245 = vrot.slane %v751, %v1244
    %v1246 = vsel %vm980, %v1245, %v1241
    %v1247 = vlaneseq
    %v1248 = vshrl.u32 %v1247, 7
    %v1249 = vsub.s32 %v982, %v1248
    %v1250 = vrot.slane %v752, %v1249
    %v1251 = vsel %vm987, %v1250, %v1246
    %v1252 = vlaneseq
    %v1253 = vshrl.u32 %v1252, 7
    %v1254 = vsub.s32 %v989, %v1253
    %v1255 = vrot.slane %v753, %v1254
    %v1256 = vsel %vm994, %v1255, %v1251
    %v1257 = vlaneseq
    %v1258 = vshrl.u32 %v1257, 7
    %v1259 = vsub.s32 %v996, %v1258
    %v1260 = vrot.slane %v754, %v1259
    %v1261 = vsel %vm1001, %v1260, %v1256
    %v1262 = vlaneseq
    %v1263 = vshrl.u32 %v1262, 7
    %v1264 = vsub.s32 %v1003, %v1263
    %v1265 = vrot.slane %v755, %v1264
    %v1266 = vsel %vm1008, %v1265, %v1261
    %v1267 = vlaneseq
    %v1268 = vshrl.u32 %v1267, 7
    %v1269 = vsub.s32 %v1010, %v1268
    %v1270 = vrot.slane %v756, %v1269
    %v1271 = vsel %vm1015, %v1270, %v1266
    %v1272 = vlaneseq
    %v1273 = vshrl.u32 %v1272, 7
    %v1274 = vsub.s32 %v1017, %v1273
    %v1275 = vrot.slane %v757, %v1274
    %v1276 = vsel %vm1022, %v1275, %v1271
    %v1277 = vlaneseq
    %v1278 = vshrl.u32 %v1277, 7
    %v1279 = vsub.s32 %v1024, %v1278
    %v1280 = vrot.slane %v758, %v1279
    %v1281 = vsel %vm1029, %v1280, %v1276
    %v1282 = vlaneseq
    %v1283 = vshrl.u32 %v1282, 7
    %v1284 = vsub.s32 %v1031, %v1283
    %v1285 = vrot.slane %v759, %v1284
    %v1286 = vsel %vm1036, %v1285, %v1281
    %v1287 = vlaneseq
    %v1288 = vshrl.u32 %v1287, 7
    %v1289 = vsub.s32 %v1038, %v1288
    %v1290 = vrot.slane %v760, %v1289
    %v1291 = vsel %vm1043, %v1290, %v1286
    %v1292 = vlaneseq
    %v1293 = vshrl.u32 %v1292, 7
    %v1294 = vsub.s32 %v1045, %v1293
    %v1295 = vrot.slane %v761, %v1294
    %v1296 = vsel %vm1050, %v1295, %v1291
    %v1297 = vlaneseq
    %v1298 = vshrl.u32 %v1297, 7
    %v1299 = vsub.s32 %v1052, %v1298
    %v1300 = vrot.slane %v762, %v1299
    %v1301 = vsel %vm1057, %v1300, %v1296
    %v1302 = vlaneseq
    %v1303 = vshrl.u32 %v1302, 7
    %v1304 = vsub.s32 %v1059, %v1303
    %v1305 = vrot.slane %v763, %v1304
    %v1306 = vsel %vm1064, %v1305, %v1301
    %v1307 = vlaneseq
    %v1308 = vshrl.u32 %v1307, 7
    %v1309 = vsub.s32 %v1066, %v1308
    %v1310 = vrot.slane %v764, %v1309
    %v1311 = vsel %vm1071, %v1310, %v1306
    %v1312 = vlaneseq
    %v1313 = vshrl.u32 %v1312, 7
    %v1314 = vsub.s32 %v1073, %v1313
    %v1315 = vrot.slane %v765, %v1314
    %v1316 = vsel %vm1078, %v1315, %v1311
    %v1317 = vlaneseq
    %v1318 = vshrl.u32 %v1317, 7
    %v1319 = vsub.s32 %v970, %v1318
    %v1320 = vrot.slane %v766, %v1319
    %v1321 = vlaneseq
    %v1322 = vshrl.u32 %v1321, 7
    %v1323 = vsub.s32 %v975, %v1322
    %v1324 = vrot.slane %v767, %v1323
    %v1325 = vsel %vm980, %v1324, %v1320
    %v1326 = vlaneseq
    %v1327 = vshrl.u32 %v1326, 7
    %v1328 = vsub.s32 %v982, %v1327
    %v1329 = vrot.slane %v768, %v1328
    %v1330 = vsel %vm987, %v1329, %v1325
    %v1331 = vlaneseq
    %v1332 = vshrl.u32 %v1331, 7
    %v1333 = vsub.s32 %v989, %v1332
    %v1334 = vrot.slane %v769, %v1333
    %v1335 = vsel %vm994, %v1334, %v1330
    %v1336 = vlaneseq
    %v1337 = vshrl.u32 %v1336, 7
    %v1338 = vsub.s32 %v996, %v1337
    %v1339 = vrot.slane %v770, %v1338
    %v1340 = vsel %vm1001, %v1339, %v1335
    %v1341 = vlaneseq
    %v1342 = vshrl.u32 %v1341, 7
    %v1343 = vsub.s32 %v1003, %v1342
    %v1344 = vrot.slane %v771, %v1343
    %v1345 = vsel %vm1008, %v1344, %v1340
    %v1346 = vlaneseq
    %v1347 = vshrl.u32 %v1346, 7
    %v1348 = vsub.s32 %v1010, %v1347
    %v1349 = vrot.slane %v772, %v1348
    %v1350 = vsel %vm1015, %v1349, %v1345
    %v1351 = vlaneseq
    %v1352 = vshrl.u32 %v1351, 7
    %v1353 = vsub.s32 %v1017, %v1352
    %v1354 = vrot.slane %v773, %v1353
    %v1355 = vsel %vm1022, %v1354, %v1350
    %v1356 = vlaneseq
    %v1357 = vshrl.u32 %v1356, 7
    %v1358 = vsub.s32 %v1024, %v1357
    %v1359 = vrot.slane %v774, %v1358
    %v1360 = vsel %vm1029, %v1359, %v1355
    %v1361 = vlaneseq
    %v1362 = vshrl.u32 %v1361, 7
    %v1363 = vsub.s32 %v1031, %v1362
    %v1364 = vrot.slane %v775, %v1363
    %v1365 = vsel %vm1036, %v1364, %v1360
    %v1366 = vlaneseq
    %v1367 = vshrl.u32 %v1366, 7
    %v1368 = vsub.s32 %v1038, %v1367
    %v1369 = vrot.slane %v776, %v1368
    %v1370 = vsel %vm1043, %v1369, %v1365
    %v1371 = vlaneseq
    %v1372 = vshrl.u32 %v1371, 7
    %v1373 = vsub.s32 %v1045, %v1372
    %v1374 = vrot.slane %v777, %v1373
    %v1375 = vsel %vm1050, %v1374, %v1370
    %v1376 = vlaneseq
    %v1377 = vshrl.u32 %v1376, 7
    %v1378 = vsub.s32 %v1052, %v1377
    %v1379 = vrot.slane %v778, %v1378
    %v1380 = vsel %vm1057, %v1379, %v1375
    %v1381 = vlaneseq
    %v1382 = vshrl.u32 %v1381, 7
    %v1383 = vsub.s32 %v1059, %v1382
    %v1384 = vrot.slane %v779, %v1383
    %v1385 = vsel %vm1064, %v1384, %v1380
    %v1386 = vlaneseq
    %v1387 = vshrl.u32 %v1386, 7
    %v1388 = vsub.s32 %v1066, %v1387
    %v1389 = vrot.slane %v780, %v1388
    %v1390 = vsel %vm1071, %v1389, %v1385
    %v1391 = vlaneseq
    %v1392 = vshrl.u32 %v1391, 7
    %v1393 = vsub.s32 %v1073, %v1392
    %v1394 = vrot.slane %v781, %v1393
    %v1395 = vsel %vm1078, %v1394, %v1390
    %v1396 = vlaneseq
    %v1397 = vshrl.u32 %v1396, 7
    %v1398 = vsub.s32 %v970, %v1397
    %v1399 = vrot.slane %v782, %v1398
    %v1400 = vlaneseq
    %v1401 = vshrl.u32 %v1400, 7
    %v1402 = vsub.s32 %v975, %v1401
    %v1403 = vrot.slane %v783, %v1402
    %v1404 = vsel %vm980, %v1403, %v1399
    %v1405 = vlaneseq
    %v1406 = vshrl.u32 %v1405, 7
    %v1407 = vsub.s32 %v982, %v1406
    %v1408 = vrot.slane %v784, %v1407
    %v1409 = vsel %vm987, %v1408, %v1404
    %v1410 = vlaneseq
    %v1411 = vshrl.u32 %v1410, 7
    %v1412 = vsub.s32 %v989, %v1411
    %v1413 = vrot.slane %v785, %v1412
    %v1414 = vsel %vm994, %v1413, %v1409
    %v1415 = vlaneseq
    %v1416 = vshrl.u32 %v1415, 7
    %v1417 = vsub.s32 %v996, %v1416
    %v1418 = vrot.slane %v786, %v1417
    %v1419 = vsel %vm1001, %v1418, %v1414
    %v1420 = vlaneseq
    %v1421 = vshrl.u32 %v1420, 7
    %v1422 = vsub.s32 %v1003, %v1421
    %v1423 = vrot.slane %v787, %v1422
    %v1424 = vsel %vm1008, %v1423, %v1419
    %v1425 = vlaneseq
    %v1426 = vshrl.u32 %v1425, 7
    %v1427 = vsub.s32 %v1010, %v1426
    %v1428 = vrot.slane %v788, %v1427
    %v1429 = vsel %vm1015, %v1428, %v1424
    %v1430 = vlaneseq
    %v1431 = vshrl.u32 %v1430, 7
    %v1432 = vsub.s32 %v1017, %v1431
    %v1433 = vrot.slane %v789, %v1432
    %v1434 = vsel %vm1022, %v1433, %v1429
    %v1435 = vlaneseq
    %v1436 = vshrl.u32 %v1435, 7
    %v1437 = vsub.s32 %v1024, %v1436
    %v1438 = vrot.slane %v790, %v1437
    %v1439 = vsel %vm1029, %v1438, %v1434
    %v1440 = vlaneseq
    %v1441 = vshrl.u32 %v1440, 7
    %v1442 = vsub.s32 %v1031, %v1441
    %v1443 = vrot.slane %v791, %v1442
    %v1444 = vsel %vm1036, %v1443, %v1439
    %v1445 = vlaneseq
    %v1446 = vshrl.u32 %v1445, 7
    %v1447 = vsub.s32 %v1038, %v1446
    %v1448 = vrot.slane %v792, %v1447
    %v1449 = vsel %vm1043, %v1448, %v1444
    %v1450 = vlaneseq
    %v1451 = vshrl.u32 %v1450, 7
    %v1452 = vsub.s32 %v1045, %v1451
    %v1453 = vrot.slane %v793, %v1452
    %v1454 = vsel %vm1050, %v1453, %v1449
    %v1455 = vlaneseq
    %v1456 = vshrl.u32 %v1455, 7
    %v1457 = vsub.s32 %v1052, %v1456
    %v1458 = vrot.slane %v794, %v1457
    %v1459 = vsel %vm1057, %v1458, %v1454
    %v1460 = vlaneseq
    %v1461 = vshrl.u32 %v1460, 7
    %v1462 = vsub.s32 %v1059, %v1461
    %v1463 = vrot.slane %v795, %v1462
    %v1464 = vsel %vm1064, %v1463, %v1459
    %v1465 = vlaneseq
    %v1466 = vshrl.u32 %v1465, 7
    %v1467 = vsub.s32 %v1066, %v1466
    %v1468 = vrot.slane %v796, %v1467
    %v1469 = vsel %vm1071, %v1468, %v1464
    %v1470 = vlaneseq
    %v1471 = vshrl.u32 %v1470, 7
    %v1472 = vsub.s32 %v1073, %v1471
    %v1473 = vrot.slane %v797, %v1472
    %v1474 = vsel %vm1078, %v1473, %v1469
    %v1475 = vlaneseq
    %v1476 = vshrl.u32 %v1475, 7
    %v1477 = vsub.s32 %v970, %v1476
    %v1478 = vrot.slane %v798, %v1477
    %v1479 = vlaneseq
    %v1480 = vshrl.u32 %v1479, 7
    %v1481 = vsub.s32 %v975, %v1480
    %v1482 = vrot.slane %v799, %v1481
    %v1483 = vsel %vm980, %v1482, %v1478
    %v1484 = vlaneseq
    %v1485 = vshrl.u32 %v1484, 7
    %v1486 = vsub.s32 %v982, %v1485
    %v1487 = vrot.slane %v800, %v1486
    %v1488 = vsel %vm987, %v1487, %v1483
    %v1489 = vlaneseq
    %v1490 = vshrl.u32 %v1489, 7
    %v1491 = vsub.s32 %v989, %v1490
    %v1492 = vrot.slane %v801, %v1491
    %v1493 = vsel %vm994, %v1492, %v1488
    %v1494 = vlaneseq
    %v1495 = vshrl.u32 %v1494, 7
    %v1496 = vsub.s32 %v996, %v1495
    %v1497 = vrot.slane %v802, %v1496
    %v1498 = vsel %vm1001, %v1497, %v1493
    %v1499 = vlaneseq
    %v1500 = vshrl.u32 %v1499, 7
    %v1501 = vsub.s32 %v1003, %v1500
    %v1502 = vrot.slane %v803, %v1501
    %v1503 = vsel %vm1008, %v1502, %v1498
    %v1504 = vlaneseq
    %v1505 = vshrl.u32 %v1504, 7
    %v1506 = vsub.s32 %v1010, %v1505
    %v1507 = vrot.slane %v804, %v1506
    %v1508 = vsel %vm1015, %v1507, %v1503
    %v1509 = vlaneseq
    %v1510 = vshrl.u32 %v1509, 7
    %v1511 = vsub.s32 %v1017, %v1510
    %v1512 = vrot.slane %v805, %v1511
    %v1513 = vsel %vm1022, %v1512, %v1508
    %v1514 = vlaneseq
    %v1515 = vshrl.u32 %v1514, 7
    %v1516 = vsub.s32 %v1024, %v1515
    %v1517 = vrot.slane %v806, %v1516
    %v1518 = vsel %vm1029, %v1517, %v1513
    %v1519 = vlaneseq
    %v1520 = vshrl.u32 %v1519, 7
    %v1521 = vsub.s32 %v1031, %v1520
    %v1522 = vrot.slane %v807, %v1521
    %v1523 = vsel %vm1036, %v1522, %v1518
    %v1524 = vlaneseq
    %v1525 = vshrl.u32 %v1524, 7
    %v1526 = vsub.s32 %v1038, %v1525
    %v1527 = vrot.slane %v808, %v1526
    %v1528 = vsel %vm1043, %v1527, %v1523
    %v1529 = vlaneseq
    %v1530 = vshrl.u32 %v1529, 7
    %v1531 = vsub.s32 %v1045, %v1530
    %v1532 = vrot.slane %v809, %v1531
    %v1533 = vsel %vm1050, %v1532, %v1528
    %v1534 = vlaneseq
    %v1535 = vshrl.u32 %v1534, 7
    %v1536 = vsub.s32 %v1052, %v1535
    %v1537 = vrot.slane %v810, %v1536
    %v1538 = vsel %vm1057, %v1537, %v1533
    %v1539 = vlaneseq
    %v1540 = vshrl.u32 %v1539, 7
    %v1541 = vsub.s32 %v1059, %v1540
    %v1542 = vrot.slane %v811, %v1541
    %v1543 = vsel %vm1064, %v1542, %v1538
    %v1544 = vlaneseq
    %v1545 = vshrl.u32 %v1544, 7
    %v1546 = vsub.s32 %v1066, %v1545
    %v1547 = vrot.slane %v812, %v1546
    %v1548 = vsel %vm1071, %v1547, %v1543
    %v1549 = vlaneseq
    %v1550 = vshrl.u32 %v1549, 7
    %v1551 = vsub.s32 %v1073, %v1550
    %v1552 = vrot.slane %v813, %v1551
    %v1553 = vsel %vm1078, %v1552, %v1548
    %v1554 = vlaneseq
    %v1555 = vshrl.u32 %v1554, 7
    %v1556 = vsub.s32 %v970, %v1555
    %v1557 = vrot.slane %v814, %v1556
    %v1558 = vlaneseq
    %v1559 = vshrl.u32 %v1558, 7
    %v1560 = vsub.s32 %v975, %v1559
    %v1561 = vrot.slane %v815, %v1560
    %v1562 = vsel %vm980, %v1561, %v1557
    %v1563 = vlaneseq
    %v1564 = vshrl.u32 %v1563, 7
    %v1565 = vsub.s32 %v982, %v1564
    %v1566 = vrot.slane %v816, %v1565
    %v1567 = vsel %vm987, %v1566, %v1562
    %v1568 = vlaneseq
    %v1569 = vshrl.u32 %v1568, 7
    %v1570 = vsub.s32 %v989, %v1569
    %v1571 = vrot.slane %v817, %v1570
    %v1572 = vsel %vm994, %v1571, %v1567
    %v1573 = vlaneseq
    %v1574 = vshrl.u32 %v1573, 7
    %v1575 = vsub.s32 %v996, %v1574
    %v1576 = vrot.slane %v818, %v1575
    %v1577 = vsel %vm1001, %v1576, %v1572
    %v1578 = vlaneseq
    %v1579 = vshrl.u32 %v1578, 7
    %v1580 = vsub.s32 %v1003, %v1579
    %v1581 = vrot.slane %v819, %v1580
    %v1582 = vsel %vm1008, %v1581, %v1577
    %v1583 = vlaneseq
    %v1584 = vshrl.u32 %v1583, 7
    %v1585 = vsub.s32 %v1010, %v1584
    %v1586 = vrot.slane %v820, %v1585
    %v1587 = vsel %vm1015, %v1586, %v1582
    %v1588 = vlaneseq
    %v1589 = vshrl.u32 %v1588, 7
    %v1590 = vsub.s32 %v1017, %v1589
    %v1591 = vrot.slane %v821, %v1590
    %v1592 = vsel %vm1022, %v1591, %v1587
    %v1593 = vlaneseq
    %v1594 = vshrl.u32 %v1593, 7
    %v1595 = vsub.s32 %v1024, %v1594
    %v1596 = vrot.slane %v822, %v1595
    %v1597 = vsel %vm1029, %v1596, %v1592
    %v1598 = vlaneseq
    %v1599 = vshrl.u32 %v1598, 7
    %v1600 = vsub.s32 %v1031, %v1599
    %v1601 = vrot.slane %v823, %v1600
    %v1602 = vsel %vm1036, %v1601, %v1597
    %v1603 = vlaneseq
    %v1604 = vshrl.u32 %v1603, 7
    %v1605 = vsub.s32 %v1038, %v1604
    %v1606 = vrot.slane %v824, %v1605
    %v1607 = vsel %vm1043, %v1606, %v1602
    %v1608 = vlaneseq
    %v1609 = vshrl.u32 %v1608, 7
    %v1610 = vsub.s32 %v1045, %v1609
    %v1611 = vrot.slane %v825, %v1610
    %v1612 = vsel %vm1050, %v1611, %v1607
    %v1613 = vlaneseq
    %v1614 = vshrl.u32 %v1613, 7
    %v1615 = vsub.s32 %v1052, %v1614
    %v1616 = vrot.slane %v826, %v1615
    %v1617 = vsel %vm1057, %v1616, %v1612
    %v1618 = vlaneseq
    %v1619 = vshrl.u32 %v1618, 7
    %v1620 = vsub.s32 %v1059, %v1619
    %v1621 = vrot.slane %v827, %v1620
    %v1622 = vsel %vm1064, %v1621, %v1617
    %v1623 = vlaneseq
    %v1624 = vshrl.u32 %v1623, 7
    %v1625 = vsub.s32 %v1066, %v1624
    %v1626 = vrot.slane %v828, %v1625
    %v1627 = vsel %vm1071, %v1626, %v1622
    %v1628 = vlaneseq
    %v1629 = vshrl.u32 %v1628, 7
    %v1630 = vsub.s32 %v1073, %v1629
    %v1631 = vrot.slane %v829, %v1630
    %v1632 = vsel %vm1078, %v1631, %v1627
    %vm1633 = vcmask 1041409
    %v1634 = vsel %vm1633, %v1158, %v1079
    %vm1635 = vcmask 1042434
    %v1636 = vsel %vm1635, %v1237, %v1634
    %vm1637 = vcmask 1043459
    %v1638 = vsel %vm1637, %v1316, %v1636
    %vm1639 = vcmask 1044484
    %v1640 = vsel %vm1639, %v1395, %v1638
    %vm1641 = vcmask 1045509
    %v1642 = vsel %vm1641, %v1474, %v1640
    %vm1643 = vcmask 1046534
    %v1644 = vsel %vm1643, %v1553, %v1642
    %vm1645 = vcmask 1047559
    %v1646 = vsel %vm1645, %v1632, %v1644
    %1648 = vmatprep.subr.mxu0 0.0
    %1649 = vmatpush1.xpose.msra.mxu0 0.0
    %1650 = vmatprep.subr.mxu0 0.0
    %1651 = vmatpush1.xpose.msra.mxu0 0.0
    %1652 = vmatprep.subr.mxu0 0.0
    %1653 = vmatpush1.xpose.msra.mxu0 0.0
    %1654 = vmatprep.subr.mxu0 0.0
    %1655 = vmatpush1.xpose.msra.mxu0 0.0
    %1656 = vmatprep.subr.mxu0 0.0
    %1657 = vmatpush1.xpose.msra.mxu0 0.0
    %1658 = vmatprep.subr.mxu0 0.0
    %1659 = vmatpush1.xpose.msra.mxu0 0.0
    %1660 = vmatprep.subr.mxu0 0.0
    %1661 = vmatpush1.xpose.msra.mxu0 0.0
    %1662 = vmatprep.subr.mxu0 0.0
    %1663 = vmatpush1.xpose.msra.mxu0 0.0
    %1664 = vmatprep.subr.mxu0 0.0
    %1665 = vmatpush1.xpose.msra.mxu0 0.0
    %1666 = vmatprep.subr.mxu0 0.0
    %1667 = vmatpush1.xpose.msra.mxu0 0.0
    %1668 = vmatprep.subr.mxu0 0.0
    %1669 = vmatpush1.xpose.msra.mxu0 0.0
    %1670 = vmatprep.subr.mxu0 0.0
    %1671 = vmatpush1.xpose.msra.mxu0 0.0
    %1672 = vmatprep.subr.mxu0 0.0
    %1673 = vmatpush1.xpose.msra.mxu0 %v833
    %1674 = vmatprep.subr.mxu0 0.0
    %1675 = vmatpush1.xpose.msra.mxu0 %v832
    %1676 = vmatprep.subr.mxu0 0.0
    %1677 = vmatpush1.xpose.msra.mxu0 %v831
    %1678 = vmatprep.subr.mxu0 0.0
    %1679 = vmatpush1.xpose.msra.mxu0 %v830
    %1680 = vmatprep.subr.mxu0 0.0
    %1681 = vmatpush2.xpose.msra.mxu0 0.0
    %1682 = vmatprep.subr.mxu0 0.0
    %1683 = vmatpush2.xpose.msra.mxu0 0.0
    %1684 = vmatprep.subr.mxu0 0.0
    %1685 = vmatpush2.xpose.msra.mxu0 0.0
    %1686 = vmatprep.subr.mxu0 0.0
    %1687 = vmatpush2.xpose.msra.mxu0 0.0
    %1688 = vmatprep.subr.mxu0 0.0
    %1689 = vmatpush2.xpose.msra.mxu0 0.0
    %1690 = vmatprep.subr.mxu0 0.0
    %1691 = vmatpush2.xpose.msra.mxu0 0.0
    %1692 = vmatprep.subr.mxu0 0.0
    %1693 = vmatpush2.xpose.msra.mxu0 0.0
    %1694 = vmatprep.subr.mxu0 0.0
    %1695 = vmatpush2.xpose.msra.mxu0 0.0
    %1696 = vmatprep.subr.mxu0 0.0
    %1697 = vmatpush2.xpose.msra.mxu0 0.0
    %1698 = vmatprep.subr.mxu0 0.0
    %1699 = vmatpush2.xpose.msra.mxu0 0.0
    %1700 = vmatprep.subr.mxu0 0.0
    %1701 = vmatpush2.xpose.msra.mxu0 0.0
    %1702 = vmatprep.subr.mxu0 0.0
    %1703 = vmatpush2.xpose.msra.mxu0 0.0
    %1704 = vmatprep.subr.mxu0 0.0
    %1705 = vmatpush2.xpose.msra.mxu0 0.0
    %1706 = vmatprep.subr.mxu0 0.0
    %1707 = vmatpush2.xpose.msra.mxu0 0.0
    %1708 = vmatprep.subr.mxu0 0.0
    %1709 = vmatpush2.xpose.msra.mxu0 0.0
    %1710 = vmatprep.subr.mxu0 0.0
    %1711 = vmatpush2.xpose.msra.mxu0 0.0
    %1712 = vmatprep.mubr.f32.mxu0 0.0
    %1713 = vmatmul.mubr.f32.gmra.mxu0 %v1646
    %v1714 = vpop.f32.mrf.mxu0
    %v1715 = vadd.f32 %v839, %v1714
    %v1716 = vpop.f32.mrf.mxu0
    %1717 = vdwg.mxu0
    %v1718 = vmul.f32 %v1715, 0.5
    %v1719 = vmul.f32 %v1715, 0.70710677
    %v1720 = verf.f32.pop %v1719
    %v1721 = vadd.f32 %v1720, 1.0
    %v1722 = vmul.f32 %v1718, %v1721
    %v1723 = vld [vmem:[#allocation7] sm:$0xff]
    %v1724 = vld [vmem:[#allocation7 + $0x8] sm:$0xff]
    %v1725 = vld [vmem:[#allocation7 + $0x10] sm:$0xff]
    %v1726 = vld [vmem:[#allocation7 + $0x18] sm:$0xff]
    %v1727 = vld [vmem:[%s4] sm:$0x1]
    %v1729 = vlaneseq
    %v1730 = vshrl.u32 %v1729, 7
    %v1731 = vsub.s32 0, %v1730
    %v1732 = vrot.slane %v1727, %v1731
    %vm1734 = vcmask 261120
    %v1736 = vsel %vm1734, %v1722, 0
    %1738 = vmatprep.subr.mxu0 0.0
    %1739 = vmatpush1.msra.mxu0 0.0
    %1740 = vmatprep.subr.mxu0 0.0
    %1741 = vmatpush1.msra.mxu0 0.0
    %1742 = vmatprep.subr.mxu0 0.0
    %1743 = vmatpush1.msra.mxu0 0.0
    %1744 = vmatprep.subr.mxu0 0.0
    %1745 = vmatpush1.msra.mxu0 0.0
    %1746 = vmatprep.subr.mxu0 0.0
    %1747 = vmatpush1.msra.mxu0 0.0
    %1748 = vmatprep.subr.mxu0 0.0
    %1749 = vmatpush1.msra.mxu0 0.0
    %1750 = vmatprep.subr.mxu0 0.0
    %1751 = vmatpush1.msra.mxu0 0.0
    %1752 = vmatprep.subr.mxu0 0.0
    %1753 = vmatpush1.msra.mxu0 0.0
    %1754 = vmatprep.subr.mxu0 0.0
    %1755 = vmatpush1.msra.mxu0 0.0
    %1756 = vmatprep.subr.mxu0 0.0
    %1757 = vmatpush1.msra.mxu0 0.0
    %1758 = vmatprep.subr.mxu0 0.0
    %1759 = vmatpush1.msra.mxu0 0.0
    %1760 = vmatprep.subr.mxu0 0.0
    %1761 = vmatpush1.msra.mxu0 0.0
    %1762 = vmatprep.subr.mxu0 0.0
    %1763 = vmatpush1.msra.mxu0 %v1726
    %1764 = vmatprep.subr.mxu0 0.0
    %1765 = vmatpush1.msra.mxu0 %v1725
    %1766 = vmatprep.subr.mxu0 0.0
    %1767 = vmatpush1.msra.mxu0 %v1724
    %1768 = vmatprep.subr.mxu0 0.0
    %1769 = vmatpush1.msra.mxu0 %v1723
    %1770 = vmatprep.subr.mxu0 0.0
    %1771 = vmatpush2.msra.mxu0 0.0
    %1772 = vmatprep.subr.mxu0 0.0
    %1773 = vmatpush2.msra.mxu0 0.0
    %1774 = vmatprep.subr.mxu0 0.0
    %1775 = vmatpush2.msra.mxu0 0.0
    %1776 = vmatprep.subr.mxu0 0.0
    %1777 = vmatpush2.msra.mxu0 0.0
    %1778 = vmatprep.subr.mxu0 0.0
    %1779 = vmatpush2.msra.mxu0 0.0
    %1780 = vmatprep.subr.mxu0 0.0
    %1781 = vmatpush2.msra.mxu0 0.0
    %1782 = vmatprep.subr.mxu0 0.0
    %1783 = vmatpush2.msra.mxu0 0.0
    %1784 = vmatprep.subr.mxu0 0.0
    %1785 = vmatpush2.msra.mxu0 0.0
    %1786 = vmatprep.subr.mxu0 0.0
    %1787 = vmatpush2.msra.mxu0 0.0
    %1788 = vmatprep.subr.mxu0 0.0
    %1789 = vmatpush2.msra.mxu0 0.0
    %1790 = vmatprep.subr.mxu0 0.0
    %1791 = vmatpush2.msra.mxu0 0.0
    %1792 = vmatprep.subr.mxu0 0.0
    %1793 = vmatpush2.msra.mxu0 0.0
    %1794 = vmatprep.subr.mxu0 0.0
    %1795 = vmatpush2.msra.mxu0 0.0
    %1796 = vmatprep.subr.mxu0 0.0
    %1797 = vmatpush2.msra.mxu0 0.0
    %1798 = vmatprep.subr.mxu0 0.0
    %1799 = vmatpush2.msra.mxu0 0.0
    %1800 = vmatprep.subr.mxu0 0.0
    %1801 = vmatpush2.msra.mxu0 0.0
    %1802 = vmatprep.mubr.f32.mxu0 0.0
    %1803 = vmatmul.mubr.f32.gmra.mxu0 %v1736
    %v1804 = vpop.f32.mrf.mxu0
    %v1805 = vadd.f32 %v1732, %v1804
    %v1806 = vpop.f32.mrf.mxu0
    %1807 = vdwg.mxu0
    %v1808 = vxor.u32 %v1805, 2147483648
    %v1809 = vmul.f32 %v1808, 1.442695
    %v1810 = vpow.pop %v1809
    %v1811 = vadd.f32 %v1810, 1.0
    %v1812 = vrcp.pop %v1811
    %v1813 = vmul.f32 1.0, %v1812
    %v1814 = vlaneseq
    %v1815 = vshrl.u32 %v1814, 7
    %v1816 = vsub.s32 0, %v1815
    %v1817 = vrot.slane %v1813, %v1816
    %1819 = vbcast.lane.b32.xlu0 %v1817, 256
    %v1820 = vpop.permute.xlu0 %1819
    %s1822 = sor.u32 256, 8
    %1823 = vbcast.lane.b32.xlu0 %v1817, %s1822
    %v1824 = vpop.permute.xlu0 %1823
    %s1826 = sor.u32 256, 16
    %1827 = vbcast.lane.b32.xlu0 %v1817, %s1826
    %v1828 = vpop.permute.xlu0 %1827
    %s1830 = sor.u32 256, 24
    %1831 = vbcast.lane.b32.xlu0 %v1817, %s1830
    %v1832 = vpop.permute.xlu0 %1831
    %s1834 = sor.u32 256, 32
    %1835 = vbcast.lane.b32.xlu0 %v1817, %s1834
    %v1836 = vpop.permute.xlu0 %1835
    %s1838 = sor.u32 256, 40
    %1839 = vbcast.lane.b32.xlu0 %v1817, %s1838
    %v1840 = vpop.permute.xlu0 %1839
    %s1842 = sor.u32 256, 48
    %1843 = vbcast.lane.b32.xlu0 %v1817, %s1842
    %v1844 = vpop.permute.xlu0 %1843
    %s1846 = sor.u32 256, 56
    %1847 = vbcast.lane.b32.xlu0 %v1817, %s1846
    %v1848 = vpop.permute.xlu0 %1847
    %s1850 = sor.u32 256, 64
    %1851 = vbcast.lane.b32.xlu0 %v1817, %s1850
    %v1852 = vpop.permute.xlu0 %1851
    %s1854 = sor.u32 256, 72
    %1855 = vbcast.lane.b32.xlu0 %v1817, %s1854
    %v1856 = vpop.permute.xlu0 %1855
    %s1858 = sor.u32 256, 80
    %1859 = vbcast.lane.b32.xlu0 %v1817, %s1858
    %v1860 = vpop.permute.xlu0 %1859
    %s1862 = sor.u32 256, 88
    %1863 = vbcast.lane.b32.xlu0 %v1817, %s1862
    %v1864 = vpop.permute.xlu0 %1863
    %s1866 = sor.u32 256, 96
    %1867 = vbcast.lane.b32.xlu0 %v1817, %s1866
    %v1868 = vpop.permute.xlu0 %1867
    %s1870 = sor.u32 256, 104
    %1871 = vbcast.lane.b32.xlu0 %v1817, %s1870
    %v1872 = vpop.permute.xlu0 %1871
    %s1874 = sor.u32 256, 112
    %1875 = vbcast.lane.b32.xlu0 %v1817, %s1874
    %v1876 = vpop.permute.xlu0 %1875
    %s1878 = sor.u32 256, 120
    %1879 = vbcast.lane.b32.xlu0 %v1817, %s1878
    %v1880 = vpop.permute.xlu0 %1879
    %v1881 = vlaneseq
    %v1882 = vshrl.u32 %v1881, 7
    %v1883 = vsub.s32 1, %v1882
    %v1884 = vrot.slane %v1813, %v1883
    %1886 = vbcast.lane.b32.xlu0 %v1884, 256
    %v1887 = vpop.permute.xlu0 %1886
    %s1889 = sor.u32 256, 8
    %1890 = vbcast.lane.b32.xlu0 %v1884, %s1889
    %v1891 = vpop.permute.xlu0 %1890
    %s1893 = sor.u32 256, 16
    %1894 = vbcast.lane.b32.xlu0 %v1884, %s1893
    %v1895 = vpop.permute.xlu0 %1894
    %s1897 = sor.u32 256, 24
    %1898 = vbcast.lane.b32.xlu0 %v1884, %s1897
    %v1899 = vpop.permute.xlu0 %1898
    %s1901 = sor.u32 256, 32
    %1902 = vbcast.lane.b32.xlu0 %v1884, %s1901
    %v1903 = vpop.permute.xlu0 %1902
    %s1905 = sor.u32 256, 40
    %1906 = vbcast.lane.b32.xlu0 %v1884, %s1905
    %v1907 = vpop.permute.xlu0 %1906
    %s1909 = sor.u32 256, 48
    %1910 = vbcast.lane.b32.xlu0 %v1884, %s1909
    %v1911 = vpop.permute.xlu0 %1910
    %s1913 = sor.u32 256, 56
    %1914 = vbcast.lane.b32.xlu0 %v1884, %s1913
    %v1915 = vpop.permute.xlu0 %1914
    %s1917 = sor.u32 256, 64
    %1918 = vbcast.lane.b32.xlu0 %v1884, %s1917
    %v1919 = vpop.permute.xlu0 %1918
    %s1921 = sor.u32 256, 72
    %1922 = vbcast.lane.b32.xlu0 %v1884, %s1921
    %v1923 = vpop.permute.xlu0 %1922
    %s1925 = sor.u32 256, 80
    %1926 = vbcast.lane.b32.xlu0 %v1884, %s1925
    %v1927 = vpop.permute.xlu0 %1926
    %s1929 = sor.u32 256, 88
    %1930 = vbcast.lane.b32.xlu0 %v1884, %s1929
    %v1931 = vpop.permute.xlu0 %1930
    %s1933 = sor.u32 256, 96
    %1934 = vbcast.lane.b32.xlu0 %v1884, %s1933
    %v1935 = vpop.permute.xlu0 %1934
    %s1937 = sor.u32 256, 104
    %1938 = vbcast.lane.b32.xlu0 %v1884, %s1937
    %v1939 = vpop.permute.xlu0 %1938
    %s1941 = sor.u32 256, 112
    %1942 = vbcast.lane.b32.xlu0 %v1884, %s1941
    %v1943 = vpop.permute.xlu0 %1942
    %s1945 = sor.u32 256, 120
    %1946 = vbcast.lane.b32.xlu0 %v1884, %s1945
    %v1947 = vpop.permute.xlu0 %1946
    %v1948 = vlaneseq
    %v1949 = vshrl.u32 %v1948, 7
    %v1950 = vsub.s32 2, %v1949
    %v1951 = vrot.slane %v1813, %v1950
    %1953 = vbcast.lane.b32.xlu0 %v1951, 256
    %v1954 = vpop.permute.xlu0 %1953
    %s1956 = sor.u32 256, 8
    %1957 = vbcast.lane.b32.xlu0 %v1951, %s1956
    %v1958 = vpop.permute.xlu0 %1957
    %s1960 = sor.u32 256, 16
    %1961 = vbcast.lane.b32.xlu0 %v1951, %s1960
    %v1962 = vpop.permute.xlu0 %1961
    %s1964 = sor.u32 256, 24
    %1965 = vbcast.lane.b32.xlu0 %v1951, %s1964
    %v1966 = vpop.permute.xlu0 %1965
    %s1968 = sor.u32 256, 32
    %1969 = vbcast.lane.b32.xlu0 %v1951, %s1968
    %v1970 = vpop.permute.xlu0 %1969
    %s1972 = sor.u32 256, 40
    %1973 = vbcast.lane.b32.xlu0 %v1951, %s1972
    %v1974 = vpop.permute.xlu0 %1973
    %s1976 = sor.u32 256, 48
    %1977 = vbcast.lane.b32.xlu0 %v1951, %s1976
    %v1978 = vpop.permute.xlu0 %1977
    %s1980 = sor.u32 256, 56
    %1981 = vbcast.lane.b32.xlu0 %v1951, %s1980
    %v1982 = vpop.permute.xlu0 %1981
    %s1984 = sor.u32 256, 64
    %1985 = vbcast.lane.b32.xlu0 %v1951, %s1984
    %v1986 = vpop.permute.xlu0 %1985
    %s1988 = sor.u32 256, 72
    %1989 = vbcast.lane.b32.xlu0 %v1951, %s1988
    %v1990 = vpop.permute.xlu0 %1989
    %s1992 = sor.u32 256, 80
    %1993 = vbcast.lane.b32.xlu0 %v1951, %s1992
    %v1994 = vpop.permute.xlu0 %1993
    %s1996 = sor.u32 256, 88
    %1997 = vbcast.lane.b32.xlu0 %v1951, %s1996
    %v1998 = vpop.permute.xlu0 %1997
    %s2000 = sor.u32 256, 96
    %2001 = vbcast.lane.b32.xlu0 %v1951, %s2000
    %v2002 = vpop.permute.xlu0 %2001
    %s2004 = sor.u32 256, 104
    %2005 = vbcast.lane.b32.xlu0 %v1951, %s2004
    %v2006 = vpop.permute.xlu0 %2005
    %s2008 = sor.u32 256, 112
    %2009 = vbcast.lane.b32.xlu0 %v1951, %s2008
    %v2010 = vpop.permute.xlu0 %2009
    %s2012 = sor.u32 256, 120
    %2013 = vbcast.lane.b32.xlu0 %v1951, %s2012
    %v2014 = vpop.permute.xlu0 %2013
    %v2015 = vlaneseq
    %v2016 = vshrl.u32 %v2015, 7
    %v2017 = vsub.s32 3, %v2016
    %v2018 = vrot.slane %v1813, %v2017
    %2020 = vbcast.lane.b32.xlu0 %v2018, 256
    %v2021 = vpop.permute.xlu0 %2020
    %s2023 = sor.u32 256, 8
    %2024 = vbcast.lane.b32.xlu0 %v2018, %s2023
    %v2025 = vpop.permute.xlu0 %2024
    %s2027 = sor.u32 256, 16
    %2028 = vbcast.lane.b32.xlu0 %v2018, %s2027
    %v2029 = vpop.permute.xlu0 %2028
    %s2031 = sor.u32 256, 24
    %2032 = vbcast.lane.b32.xlu0 %v2018, %s2031
    %v2033 = vpop.permute.xlu0 %2032
    %s2035 = sor.u32 256, 32
    %2036 = vbcast.lane.b32.xlu0 %v2018, %s2035
    %v2037 = vpop.permute.xlu0 %2036
    %s2039 = sor.u32 256, 40
    %2040 = vbcast.lane.b32.xlu0 %v2018, %s2039
    %v2041 = vpop.permute.xlu0 %2040
    %s2043 = sor.u32 256, 48
    %2044 = vbcast.lane.b32.xlu0 %v2018, %s2043
    %v2045 = vpop.permute.xlu0 %2044
    %s2047 = sor.u32 256, 56
    %2048 = vbcast.lane.b32.xlu0 %v2018, %s2047
    %v2049 = vpop.permute.xlu0 %2048
    %s2051 = sor.u32 256, 64
    %2052 = vbcast.lane.b32.xlu0 %v2018, %s2051
    %v2053 = vpop.permute.xlu0 %2052
    %s2055 = sor.u32 256, 72
    %2056 = vbcast.lane.b32.xlu0 %v2018, %s2055
    %v2057 = vpop.permute.xlu0 %2056
    %s2059 = sor.u32 256, 80
    %2060 = vbcast.lane.b32.xlu0 %v2018, %s2059
    %v2061 = vpop.permute.xlu0 %2060
    %s2063 = sor.u32 256, 88
    %2064 = vbcast.lane.b32.xlu0 %v2018, %s2063
    %v2065 = vpop.permute.xlu0 %2064
    %s2067 = sor.u32 256, 96
    %2068 = vbcast.lane.b32.xlu0 %v2018, %s2067
    %v2069 = vpop.permute.xlu0 %2068
    %s2071 = sor.u32 256, 104
    %2072 = vbcast.lane.b32.xlu0 %v2018, %s2071
    %v2073 = vpop.permute.xlu0 %2072
    %s2075 = sor.u32 256, 112
    %2076 = vbcast.lane.b32.xlu0 %v2018, %s2075
    %v2077 = vpop.permute.xlu0 %2076
    %s2079 = sor.u32 256, 120
    %2080 = vbcast.lane.b32.xlu0 %v2018, %s2079
    %v2081 = vpop.permute.xlu0 %2080
    %v2082 = vlaneseq
    %v2083 = vshrl.u32 %v2082, 7
    %v2084 = vsub.s32 4, %v2083
    %v2085 = vrot.slane %v1813, %v2084
    %2087 = vbcast.lane.b32.xlu0 %v2085, 256
    %v2088 = vpop.permute.xlu0 %2087
    %s2090 = sor.u32 256, 8
    %2091 = vbcast.lane.b32.xlu0 %v2085, %s2090
    %v2092 = vpop.permute.xlu0 %2091
    %s2094 = sor.u32 256, 16
    %2095 = vbcast.lane.b32.xlu0 %v2085, %s2094
    %v2096 = vpop.permute.xlu0 %2095
    %s2098 = sor.u32 256, 24
    %2099 = vbcast.lane.b32.xlu0 %v2085, %s2098
    %v2100 = vpop.permute.xlu0 %2099
    %s2102 = sor.u32 256, 32
    %2103 = vbcast.lane.b32.xlu0 %v2085, %s2102
    %v2104 = vpop.permute.xlu0 %2103
    %s2106 = sor.u32 256, 40
    %2107 = vbcast.lane.b32.xlu0 %v2085, %s2106
    %v2108 = vpop.permute.xlu0 %2107
    %s2110 = sor.u32 256, 48
    %2111 = vbcast.lane.b32.xlu0 %v2085, %s2110
    %v2112 = vpop.permute.xlu0 %2111
    %s2114 = sor.u32 256, 56
    %2115 = vbcast.lane.b32.xlu0 %v2085, %s2114
    %v2116 = vpop.permute.xlu0 %2115
    %s2118 = sor.u32 256, 64
    %2119 = vbcast.lane.b32.xlu0 %v2085, %s2118
    %v2120 = vpop.permute.xlu0 %2119
    %s2122 = sor.u32 256, 72
    %2123 = vbcast.lane.b32.xlu0 %v2085, %s2122
    %v2124 = vpop.permute.xlu0 %2123
    %s2126 = sor.u32 256, 80
    %2127 = vbcast.lane.b32.xlu0 %v2085, %s2126
    %v2128 = vpop.permute.xlu0 %2127
    %s2130 = sor.u32 256, 88
    %2131 = vbcast.lane.b32.xlu0 %v2085, %s2130
    %v2132 = vpop.permute.xlu0 %2131
    %s2134 = sor.u32 256, 96
    %2135 = vbcast.lane.b32.xlu0 %v2085, %s2134
    %v2136 = vpop.permute.xlu0 %2135
    %s2138 = sor.u32 256, 104
    %2139 = vbcast.lane.b32.xlu0 %v2085, %s2138
    %v2140 = vpop.permute.xlu0 %2139
    %s2142 = sor.u32 256, 112
    %2143 = vbcast.lane.b32.xlu0 %v2085, %s2142
    %v2144 = vpop.permute.xlu0 %2143
    %s2146 = sor.u32 256, 120
    %2147 = vbcast.lane.b32.xlu0 %v2085, %s2146
    %v2148 = vpop.permute.xlu0 %2147
    %v2149 = vlaneseq
    %v2150 = vshrl.u32 %v2149, 7
    %v2151 = vsub.s32 5, %v2150
    %v2152 = vrot.slane %v1813, %v2151
    %2154 = vbcast.lane.b32.xlu0 %v2152, 256
    %v2155 = vpop.permute.xlu0 %2154
    %s2157 = sor.u32 256, 8
    %2158 = vbcast.lane.b32.xlu0 %v2152, %s2157
    %v2159 = vpop.permute.xlu0 %2158
    %s2161 = sor.u32 256, 16
    %2162 = vbcast.lane.b32.xlu0 %v2152, %s2161
    %v2163 = vpop.permute.xlu0 %2162
    %s2165 = sor.u32 256, 24
    %2166 = vbcast.lane.b32.xlu0 %v2152, %s2165
    %v2167 = vpop.permute.xlu0 %2166
    %s2169 = sor.u32 256, 32
    %2170 = vbcast.lane.b32.xlu0 %v2152, %s2169
    %v2171 = vpop.permute.xlu0 %2170
    %s2173 = sor.u32 256, 40
    %2174 = vbcast.lane.b32.xlu0 %v2152, %s2173
    %v2175 = vpop.permute.xlu0 %2174
    %s2177 = sor.u32 256, 48
    %2178 = vbcast.lane.b32.xlu0 %v2152, %s2177
    %v2179 = vpop.permute.xlu0 %2178
    %s2181 = sor.u32 256, 56
    %2182 = vbcast.lane.b32.xlu0 %v2152, %s2181
    %v2183 = vpop.permute.xlu0 %2182
    %s2185 = sor.u32 256, 64
    %2186 = vbcast.lane.b32.xlu0 %v2152, %s2185
    %v2187 = vpop.permute.xlu0 %2186
    %s2189 = sor.u32 256, 72
    %2190 = vbcast.lane.b32.xlu0 %v2152, %s2189
    %v2191 = vpop.permute.xlu0 %2190
    %s2193 = sor.u32 256, 80
    %2194 = vbcast.lane.b32.xlu0 %v2152, %s2193
    %v2195 = vpop.permute.xlu0 %2194
    %s2197 = sor.u32 256, 88
    %2198 = vbcast.lane.b32.xlu0 %v2152, %s2197
    %v2199 = vpop.permute.xlu0 %2198
    %s2201 = sor.u32 256, 96
    %2202 = vbcast.lane.b32.xlu0 %v2152, %s2201
    %v2203 = vpop.permute.xlu0 %2202
    %s2205 = sor.u32 256, 104
    %2206 = vbcast.lane.b32.xlu0 %v2152, %s2205
    %v2207 = vpop.permute.xlu0 %2206
    %s2209 = sor.u32 256, 112
    %2210 = vbcast.lane.b32.xlu0 %v2152, %s2209
    %v2211 = vpop.permute.xlu0 %2210
    %s2213 = sor.u32 256, 120
    %2214 = vbcast.lane.b32.xlu0 %v2152, %s2213
    %v2215 = vpop.permute.xlu0 %2214
    %v2216 = vlaneseq
    %v2217 = vshrl.u32 %v2216, 7
    %v2218 = vsub.s32 6, %v2217
    %v2219 = vrot.slane %v1813, %v2218
    %2221 = vbcast.lane.b32.xlu0 %v2219, 256
    %v2222 = vpop.permute.xlu0 %2221
    %s2224 = sor.u32 256, 8
    %2225 = vbcast.lane.b32.xlu0 %v2219, %s2224
    %v2226 = vpop.permute.xlu0 %2225
    %s2228 = sor.u32 256, 16
    %2229 = vbcast.lane.b32.xlu0 %v2219, %s2228
    %v2230 = vpop.permute.xlu0 %2229
    %s2232 = sor.u32 256, 24
    %2233 = vbcast.lane.b32.xlu0 %v2219, %s2232
    %v2234 = vpop.permute.xlu0 %2233
    %s2236 = sor.u32 256, 32
    %2237 = vbcast.lane.b32.xlu0 %v2219, %s2236
    %v2238 = vpop.permute.xlu0 %2237
    %s2240 = sor.u32 256, 40
    %2241 = vbcast.lane.b32.xlu0 %v2219, %s2240
    %v2242 = vpop.permute.xlu0 %2241
    %s2244 = sor.u32 256, 48
    %2245 = vbcast.lane.b32.xlu0 %v2219, %s2244
    %v2246 = vpop.permute.xlu0 %2245
    %s2248 = sor.u32 256, 56
    %2249 = vbcast.lane.b32.xlu0 %v2219, %s2248
    %v2250 = vpop.permute.xlu0 %2249
    %s2252 = sor.u32 256, 64
    %2253 = vbcast.lane.b32.xlu0 %v2219, %s2252
    %v2254 = vpop.permute.xlu0 %2253
    %s2256 = sor.u32 256, 72
    %2257 = vbcast.lane.b32.xlu0 %v2219, %s2256
    %v2258 = vpop.permute.xlu0 %2257
    %s2260 = sor.u32 256, 80
    %2261 = vbcast.lane.b32.xlu0 %v2219, %s2260
    %v2262 = vpop.permute.xlu0 %2261
    %s2264 = sor.u32 256, 88
    %2265 = vbcast.lane.b32.xlu0 %v2219, %s2264
    %v2266 = vpop.permute.xlu0 %2265
    %s2268 = sor.u32 256, 96
    %2269 = vbcast.lane.b32.xlu0 %v2219, %s2268
    %v2270 = vpop.permute.xlu0 %2269
    %s2272 = sor.u32 256, 104
    %2273 = vbcast.lane.b32.xlu0 %v2219, %s2272
    %v2274 = vpop.permute.xlu0 %2273
    %s2276 = sor.u32 256, 112
    %2277 = vbcast.lane.b32.xlu0 %v2219, %s2276
    %v2278 = vpop.permute.xlu0 %2277
    %s2280 = sor.u32 256, 120
    %2281 = vbcast.lane.b32.xlu0 %v2219, %s2280
    %v2282 = vpop.permute.xlu0 %2281
    %v2283 = vlaneseq
    %v2284 = vshrl.u32 %v2283, 7
    %v2285 = vsub.s32 7, %v2284
    %v2286 = vrot.slane %v1813, %v2285
    %2288 = vbcast.lane.b32.xlu0 %v2286, 256
    %v2289 = vpop.permute.xlu0 %2288
    %s2291 = sor.u32 256, 8
    %2292 = vbcast.lane.b32.xlu0 %v2286, %s2291
    %v2293 = vpop.permute.xlu0 %2292
    %s2295 = sor.u32 256, 16
    %2296 = vbcast.lane.b32.xlu0 %v2286, %s2295
    %v2297 = vpop.permute.xlu0 %2296
    %s2299 = sor.u32 256, 24
    %2300 = vbcast.lane.b32.xlu0 %v2286, %s2299
    %v2301 = vpop.permute.xlu0 %2300
    %s2303 = sor.u32 256, 32
    %2304 = vbcast.lane.b32.xlu0 %v2286, %s2303
    %v2305 = vpop.permute.xlu0 %2304
    %s2307 = sor.u32 256, 40
    %2308 = vbcast.lane.b32.xlu0 %v2286, %s2307
    %v2309 = vpop.permute.xlu0 %2308
    %s2311 = sor.u32 256, 48
    %2312 = vbcast.lane.b32.xlu0 %v2286, %s2311
    %v2313 = vpop.permute.xlu0 %2312
    %s2315 = sor.u32 256, 56
    %2316 = vbcast.lane.b32.xlu0 %v2286, %s2315
    %v2317 = vpop.permute.xlu0 %2316
    %s2319 = sor.u32 256, 64
    %2320 = vbcast.lane.b32.xlu0 %v2286, %s2319
    %v2321 = vpop.permute.xlu0 %2320
    %s2323 = sor.u32 256, 72
    %2324 = vbcast.lane.b32.xlu0 %v2286, %s2323
    %v2325 = vpop.permute.xlu0 %2324
    %s2327 = sor.u32 256, 80
    %2328 = vbcast.lane.b32.xlu0 %v2286, %s2327
    %v2329 = vpop.permute.xlu0 %2328
    %s2331 = sor.u32 256, 88
    %2332 = vbcast.lane.b32.xlu0 %v2286, %s2331
    %v2333 = vpop.permute.xlu0 %2332
    %s2335 = sor.u32 256, 96
    %2336 = vbcast.lane.b32.xlu0 %v2286, %s2335
    %v2337 = vpop.permute.xlu0 %2336
    %s2339 = sor.u32 256, 104
    %2340 = vbcast.lane.b32.xlu0 %v2286, %s2339
    %v2341 = vpop.permute.xlu0 %2340
    %s2343 = sor.u32 256, 112
    %2344 = vbcast.lane.b32.xlu0 %v2286, %s2343
    %v2345 = vpop.permute.xlu0 %2344
    %s2347 = sor.u32 256, 120
    %2348 = vbcast.lane.b32.xlu0 %v2286, %s2347
    %v2349 = vpop.permute.xlu0 %2348
    %v2350 = vmul.f32 %v62, %v1820
    %v2351 = vmul.f32 %v63, %v1820
    %v2352 = vmul.f32 %v64, %v1824
    %v2353 = vmul.f32 %v65, %v1824
    %v2354 = vmul.f32 %v66, %v1828
    %v2355 = vmul.f32 %v67, %v1828
    %v2356 = vmul.f32 %v68, %v1832
    %v2357 = vmul.f32 %v69, %v1832
    %v2358 = vmul.f32 %v70, %v1836
    %v2359 = vmul.f32 %v71, %v1836
    %v2360 = vmul.f32 %v72, %v1840
    %v2361 = vmul.f32 %v73, %v1840
    %v2362 = vmul.f32 %v74, %v1844
    %v2363 = vmul.f32 %v75, %v1844
    %v2364 = vmul.f32 %v76, %v1848
    %v2365 = vmul.f32 %v77, %v1848
    %v2366 = vmul.f32 %v78, %v1852
    %v2367 = vmul.f32 %v79, %v1852
    %v2368 = vmul.f32 %v80, %v1856
    %v2369 = vmul.f32 %v81, %v1856
    %v2370 = vmul.f32 %v82, %v1860
    %v2371 = vmul.f32 %v83, %v1860
    %v2372 = vmul.f32 %v84, %v1864
    %v2373 = vmul.f32 %v85, %v1864
    %v2374 = vmul.f32 %v86, %v1868
    %v2375 = vmul.f32 %v87, %v1868
    %v2376 = vmul.f32 %v88, %v1872
    %v2377 = vmul.f32 %v89, %v1872
    %v2378 = vmul.f32 %v90, %v1876
    %v2379 = vmul.f32 %v91, %v1876
    %v2380 = vmul.f32 %v92, %v1880
    %v2381 = vmul.f32 %v93, %v1880
    %v2382 = vmul.f32 %v94, %v1887
    %v2383 = vmul.f32 %v95, %v1887
    %v2384 = vmul.f32 %v96, %v1891
    %v2385 = vmul.f32 %v97, %v1891
    %v2386 = vmul.f32 %v98, %v1895
    %v2387 = vmul.f32 %v99, %v1895
    %v2388 = vmul.f32 %v100, %v1899
    %v2389 = vmul.f32 %v101, %v1899
    %v2390 = vmul.f32 %v102, %v1903
    %v2391 = vmul.f32 %v103, %v1903
    %v2392 = vmul.f32 %v104, %v1907
    %v2393 = vmul.f32 %v105, %v1907
    %v2394 = vmul.f32 %v106, %v1911
    %v2395 = vmul.f32 %v107, %v1911
    %v2396 = vmul.f32 %v108, %v1915
    %v2397 = vmul.f32 %v109, %v1915
    %v2398 = vmul.f32 %v110, %v1919
    %v2399 = vmul.f32 %v111, %v1919
    %v2400 = vmul.f32 %v112, %v1923
    %v2401 = vmul.f32 %v113, %v1923
    %v2402 = vmul.f32 %v114, %v1927
    %v2403 = vmul.f32 %v115, %v1927
    %v2404 = vmul.f32 %v116, %v1931
    %v2405 = vmul.f32 %v117, %v1931
    %v2406 = vmul.f32 %v118, %v1935
    %v2407 = vmul.f32 %v119, %v1935
    %v2408 = vmul.f32 %v120, %v1939
    %v2409 = vmul.f32 %v121, %v1939
    %v2410 = vmul.f32 %v122, %v1943
    %v2411 = vmul.f32 %v123, %v1943
    %v2412 = vmul.f32 %v124, %v1947
    %v2413 = vmul.f32 %v125, %v1947
    %v2414 = vmul.f32 %v126, %v1954
    %v2415 = vmul.f32 %v127, %v1954
    %v2416 = vmul.f32 %v128, %v1958
    %v2417 = vmul.f32 %v129, %v1958
    %v2418 = vmul.f32 %v130, %v1962
    %v2419 = vmul.f32 %v131, %v1962
    %v2420 = vmul.f32 %v132, %v1966
    %v2421 = vmul.f32 %v133, %v1966
    %v2422 = vmul.f32 %v134, %v1970
    %v2423 = vmul.f32 %v135, %v1970
    %v2424 = vmul.f32 %v136, %v1974
    %v2425 = vmul.f32 %v137, %v1974
    %v2426 = vmul.f32 %v138, %v1978
    %v2427 = vmul.f32 %v139, %v1978
    %v2428 = vmul.f32 %v140, %v1982
    %v2429 = vmul.f32 %v141, %v1982
    %v2430 = vmul.f32 %v142, %v1986
    %v2431 = vmul.f32 %v143, %v1986
    %v2432 = vmul.f32 %v144, %v1990
    %v2433 = vmul.f32 %v145, %v1990
    %v2434 = vmul.f32 %v146, %v1994
    %v2435 = vmul.f32 %v147, %v1994
    %v2436 = vmul.f32 %v148, %v1998
    %v2437 = vmul.f32 %v149, %v1998
    %v2438 = vmul.f32 %v150, %v2002
    %v2439 = vmul.f32 %v151, %v2002
    %v2440 = vmul.f32 %v152, %v2006
    %v2441 = vmul.f32 %v153, %v2006
    %v2442 = vmul.f32 %v154, %v2010
    %v2443 = vmul.f32 %v155, %v2010
    %v2444 = vmul.f32 %v156, %v2014
    %v2445 = vmul.f32 %v157, %v2014
    %v2446 = vmul.f32 %v158, %v2021
    %v2447 = vmul.f32 %v159, %v2021
    %v2448 = vmul.f32 %v160, %v2025
    %v2449 = vmul.f32 %v161, %v2025
    %v2450 = vmul.f32 %v162, %v2029
    %v2451 = vmul.f32 %v163, %v2029
    %v2452 = vmul.f32 %v164, %v2033
    %v2453 = vmul.f32 %v165, %v2033
    %v2454 = vmul.f32 %v166, %v2037
    %v2455 = vmul.f32 %v167, %v2037
    %v2456 = vmul.f32 %v168, %v2041
    %v2457 = vmul.f32 %v169, %v2041
    %v2458 = vmul.f32 %v170, %v2045
    %v2459 = vmul.f32 %v171, %v2045
    %v2460 = vmul.f32 %v172, %v2049
    %v2461 = vmul.f32 %v173, %v2049
    %v2462 = vmul.f32 %v174, %v2053
    %v2463 = vmul.f32 %v175, %v2053
    %v2464 = vmul.f32 %v176, %v2057
    %v2465 = vmul.f32 %v177, %v2057
    %v2466 = vmul.f32 %v178, %v2061
    %v2467 = vmul.f32 %v179, %v2061
    %v2468 = vmul.f32 %v180, %v2065
    %v2469 = vmul.f32 %v181, %v2065
    %v2470 = vmul.f32 %v182, %v2069
    %v2471 = vmul.f32 %v183, %v2069
    %v2472 = vmul.f32 %v184, %v2073
    %v2473 = vmul.f32 %v185, %v2073
    %v2474 = vmul.f32 %v186, %v2077
    %v2475 = vmul.f32 %v187, %v2077
    %v2476 = vmul.f32 %v188, %v2081
    %v2477 = vmul.f32 %v189, %v2081
    %v2478 = vmul.f32 %v190, %v2088
    %v2479 = vmul.f32 %v191, %v2088
    %v2480 = vmul.f32 %v192, %v2092
    %v2481 = vmul.f32 %v193, %v2092
    %v2482 = vmul.f32 %v194, %v2096
    %v2483 = vmul.f32 %v195, %v2096
    %v2484 = vmul.f32 %v196, %v2100
    %v2485 = vmul.f32 %v197, %v2100
    %v2486 = vmul.f32 %v198, %v2104
    %v2487 = vmul.f32 %v199, %v2104
    %v2488 = vmul.f32 %v200, %v2108
    %v2489 = vmul.f32 %v201, %v2108
    %v2490 = vmul.f32 %v202, %v2112
    %v2491 = vmul.f32 %v203, %v2112
    %v2492 = vmul.f32 %v204, %v2116
    %v2493 = vmul.f32 %v205, %v2116
    %v2494 = vmul.f32 %v206, %v2120
    %v2495 = vmul.f32 %v207, %v2120
    %v2496 = vmul.f32 %v208, %v2124
    %v2497 = vmul.f32 %v209, %v2124
    %v2498 = vmul.f32 %v210, %v2128
    %v2499 = vmul.f32 %v211, %v2128
    %v2500 = vmul.f32 %v212, %v2132
    %v2501 = vmul.f32 %v213, %v2132
    %v2502 = vmul.f32 %v214, %v2136
    %v2503 = vmul.f32 %v215, %v2136
    %v2504 = vmul.f32 %v216, %v2140
    %v2505 = vmul.f32 %v217, %v2140
    %v2506 = vmul.f32 %v218, %v2144
    %v2507 = vmul.f32 %v219, %v2144
    %v2508 = vmul.f32 %v220, %v2148
    %v2509 = vmul.f32 %v221, %v2148
    %v2510 = vmul.f32 %v222, %v2155
    %v2511 = vmul.f32 %v223, %v2155
    %v2512 = vmul.f32 %v224, %v2159
    %v2513 = vmul.f32 %v225, %v2159
    %v2514 = vmul.f32 %v226, %v2163
    %v2515 = vmul.f32 %v227, %v2163
    %v2516 = vmul.f32 %v228, %v2167
    %v2517 = vmul.f32 %v229, %v2167
    %v2518 = vmul.f32 %v230, %v2171
    %v2519 = vmul.f32 %v231, %v2171
    %v2520 = vmul.f32 %v232, %v2175
    %v2521 = vmul.f32 %v233, %v2175
    %v2522 = vmul.f32 %v234, %v2179
    %v2523 = vmul.f32 %v235, %v2179
    %v2524 = vmul.f32 %v236, %v2183
    %v2525 = vmul.f32 %v237, %v2183
    %v2526 = vmul.f32 %v238, %v2187
    %v2527 = vmul.f32 %v239, %v2187
    %v2528 = vmul.f32 %v240, %v2191
    %v2529 = vmul.f32 %v241, %v2191
    %v2530 = vmul.f32 %v242, %v2195
    %v2531 = vmul.f32 %v243, %v2195
    %v2532 = vmul.f32 %v244, %v2199
    %v2533 = vmul.f32 %v245, %v2199
    %v2534 = vmul.f32 %v246, %v2203
    %v2535 = vmul.f32 %v247, %v2203
    %v2536 = vmul.f32 %v248, %v2207
    %v2537 = vmul.f32 %v249, %v2207
    %v2538 = vmul.f32 %v250, %v2211
    %v2539 = vmul.f32 %v251, %v2211
    %v2540 = vmul.f32 %v252, %v2215
    %v2541 = vmul.f32 %v253, %v2215
    %v2542 = vmul.f32 %v254, %v2222
    %v2543 = vmul.f32 %v255, %v2222
    %v2544 = vmul.f32 %v256, %v2226
    %v2545 = vmul.f32 %v257, %v2226
    %v2546 = vmul.f32 %v258, %v2230
    %v2547 = vmul.f32 %v259, %v2230
    %v2548 = vmul.f32 %v260, %v2234
    %v2549 = vmul.f32 %v261, %v2234
    %v2550 = vmul.f32 %v262, %v2238
    %v2551 = vmul.f32 %v263, %v2238
    %v2552 = vmul.f32 %v264, %v2242
    %v2553 = vmul.f32 %v265, %v2242
    %v2554 = vmul.f32 %v266, %v2246
    %v2555 = vmul.f32 %v267, %v2246
    %v2556 = vmul.f32 %v268, %v2250
    %v2557 = vmul.f32 %v269, %v2250
    %v2558 = vmul.f32 %v270, %v2254
    %v2559 = vmul.f32 %v271, %v2254
    %v2560 = vmul.f32 %v272, %v2258
    %v2561 = vmul.f32 %v273, %v2258
    %v2562 = vmul.f32 %v274, %v2262
    %v2563 = vmul.f32 %v275, %v2262
    %v2564 = vmul.f32 %v276, %v2266
    %v2565 = vmul.f32 %v277, %v2266
    %v2566 = vmul.f32 %v278, %v2270
    %v2567 = vmul.f32 %v279, %v2270
    %v2568 = vmul.f32 %v280, %v2274
    %v2569 = vmul.f32 %v281, %v2274
    %v2570 = vmul.f32 %v282, %v2278
    %v2571 = vmul.f32 %v283, %v2278
    %v2572 = vmul.f32 %v284, %v2282
    %v2573 = vmul.f32 %v285, %v2282
    %v2574 = vmul.f32 %v286, %v2289
    %v2575 = vmul.f32 %v287, %v2289
    %v2576 = vmul.f32 %v288, %v2293
    %v2577 = vmul.f32 %v289, %v2293
    %v2578 = vmul.f32 %v290, %v2297
    %v2579 = vmul.f32 %v291, %v2297
    %v2580 = vmul.f32 %v292, %v2301
    %v2581 = vmul.f32 %v293, %v2301
    %v2582 = vmul.f32 %v294, %v2305
    %v2583 = vmul.f32 %v295, %v2305
    %v2584 = vmul.f32 %v296, %v2309
    %v2585 = vmul.f32 %v297, %v2309
    %v2586 = vmul.f32 %v298, %v2313
    %v2587 = vmul.f32 %v299, %v2313
    %v2588 = vmul.f32 %v300, %v2317
    %v2589 = vmul.f32 %v301, %v2317
    %v2590 = vmul.f32 %v302, %v2321
    %v2591 = vmul.f32 %v303, %v2321
    %v2592 = vmul.f32 %v304, %v2325
    %v2593 = vmul.f32 %v305, %v2325
    %v2594 = vmul.f32 %v306, %v2329
    %v2595 = vmul.f32 %v307, %v2329
    %v2596 = vmul.f32 %v308, %v2333
    %v2597 = vmul.f32 %v309, %v2333
    %v2598 = vmul.f32 %v310, %v2337
    %v2599 = vmul.f32 %v311, %v2337
    %v2600 = vmul.f32 %v312, %v2341
    %v2601 = vmul.f32 %v313, %v2341
    %v2602 = vmul.f32 %v314, %v2345
    %v2603 = vmul.f32 %v315, %v2345
    %v2604 = vmul.f32 %v316, %v2349
    %v2605 = vmul.f32 %v317, %v2349
    %2606 = vst [vmem:[#allocation8] sm:$0xff] %v2350
    %2607 = vst [vmem:[#allocation8 + $0x8] sm:$0xff] %v2351
    %2608 = vst [vmem:[#allocation8 + $0x10] sm:$0xff] %v2352
    %2609 = vst [vmem:[#allocation8 + $0x18] sm:$0xff] %v2353
    %2610 = vst [vmem:[#allocation8 + $0x20] sm:$0xff] %v2354
    %2611 = vst [vmem:[#allocation8 + $0x28] sm:$0xff] %v2355
    %2612 = vst [vmem:[#allocation8 + $0x30] sm:$0xff] %v2356
    %2613 = vst [vmem:[#allocation8 + $0x38] sm:$0xff] %v2357
    %2614 = vst [vmem:[#allocation8 + $0x40] sm:$0xff] %v2358
    %2615 = vst [vmem:[#allocation8 + $0x48] sm:$0xff] %v2359
    %2616 = vst [vmem:[#allocation8 + $0x50] sm:$0xff] %v2360
    %2617 = vst [vmem:[#allocation8 + $0x58] sm:$0xff] %v2361
    %2618 = vst [vmem:[#allocation8 + $0x60] sm:$0xff] %v2362
    %2619 = vst [vmem:[#allocation8 + $0x68] sm:$0xff] %v2363
    %2620 = vst [vmem:[#allocation8 + $0x70] sm:$0xff] %v2364
    %2621 = vst [vmem:[#allocation8 + $0x78] sm:$0xff] %v2365
    %2622 = vst [vmem:[#allocation8 + $0x80] sm:$0xff] %v2366
    %2623 = vst [vmem:[#allocation8 + $0x88] sm:$0xff] %v2367
    %2624 = vst [vmem:[#allocation8 + $0x90] sm:$0xff] %v2368
    %2625 = vst [vmem:[#allocation8 + $0x98] sm:$0xff] %v2369
    %2626 = vst [vmem:[#allocation8 + $0xa0] sm:$0xff] %v2370
    %2627 = vst [vmem:[#allocation8 + $0xa8] sm:$0xff] %v2371
    %2628 = vst [vmem:[#allocation8 + $0xb0] sm:$0xff] %v2372
    %2629 = vst [vmem:[#allocation8 + $0xb8] sm:$0xff] %v2373
    %2630 = vst [vmem:[#allocation8 + $0xc0] sm:$0xff] %v2374
    %2631 = vst [vmem:[#allocation8 + $0xc8] sm:$0xff] %v2375
    %2632 = vst [vmem:[#allocation8 + $0xd0] sm:$0xff] %v2376
    %2633 = vst [vmem:[#allocation8 + $0xd8] sm:$0xff] %v2377
    %2634 = vst [vmem:[#allocation8 + $0xe0] sm:$0xff] %v2378
    %2635 = vst [vmem:[#allocation8 + $0xe8] sm:$0xff] %v2379
    %2636 = vst [vmem:[#allocation8 + $0xf0] sm:$0xff] %v2380
    %2637 = vst [vmem:[#allocation8 + $0xf8] sm:$0xff] %v2381
    %2638 = vst [vmem:[#allocation8 + $0x100] sm:$0xff] %v2382
    %2639 = vst [vmem:[#allocation8 + $0x108] sm:$0xff] %v2383
    %2640 = vst [vmem:[#allocation8 + $0x110] sm:$0xff] %v2384
    %2641 = vst [vmem:[#allocation8 + $0x118] sm:$0xff] %v2385
    %2642 = vst [vmem:[#allocation8 + $0x120] sm:$0xff] %v2386
    %2643 = vst [vmem:[#allocation8 + $0x128] sm:$0xff] %v2387
    %2644 = vst [vmem:[#allocation8 + $0x130] sm:$0xff] %v2388
    %2645 = vst [vmem:[#allocation8 + $0x138] sm:$0xff] %v2389
    %2646 = vst [vmem:[#allocation8 + $0x140] sm:$0xff] %v2390
    %2647 = vst [vmem:[#allocation8 + $0x148] sm:$0xff] %v2391
    %2648 = vst [vmem:[#allocation8 + $0x150] sm:$0xff] %v2392
    %2649 = vst [vmem:[#allocation8 + $0x158] sm:$0xff] %v2393
    %2650 = vst [vmem:[#allocation8 + $0x160] sm:$0xff] %v2394
    %2651 = vst [vmem:[#allocation8 + $0x168] sm:$0xff] %v2395
    %2652 = vst [vmem:[#allocation8 + $0x170] sm:$0xff] %v2396
    %2653 = vst [vmem:[#allocation8 + $0x178] sm:$0xff] %v2397
    %2654 = vst [vmem:[#allocation8 + $0x180] sm:$0xff] %v2398
    %2655 = vst [vmem:[#allocation8 + $0x188] sm:$0xff] %v2399
    %2656 = vst [vmem:[#allocation8 + $0x190] sm:$0xff] %v2400
    %2657 = vst [vmem:[#allocation8 + $0x198] sm:$0xff] %v2401
    %2658 = vst [vmem:[#allocation8 + $0x1a0] sm:$0xff] %v2402
    %2659 = vst [vmem:[#allocation8 + $0x1a8] sm:$0xff] %v2403
    %2660 = vst [vmem:[#allocation8 + $0x1b0] sm:$0xff] %v2404
    %2661 = vst [vmem:[#allocation8 + $0x1b8] sm:$0xff] %v2405
    %2662 = vst [vmem:[#allocation8 + $0x1c0] sm:$0xff] %v2406
    %2663 = vst [vmem:[#allocation8 + $0x1c8] sm:$0xff] %v2407
    %2664 = vst [vmem:[#allocation8 + $0x1d0] sm:$0xff] %v2408
    %2665 = vst [vmem:[#allocation8 + $0x1d8] sm:$0xff] %v2409
    %2666 = vst [vmem:[#allocation8 + $0x1e0] sm:$0xff] %v2410
    %2667 = vst [vmem:[#allocation8 + $0x1e8] sm:$0xff] %v2411
    %2668 = vst [vmem:[#allocation8 + $0x1f0] sm:$0xff] %v2412
    %2669 = vst [vmem:[#allocation8 + $0x1f8] sm:$0xff] %v2413
    %2670 = vst [vmem:[#allocation8 + $0x200] sm:$0xff] %v2414
    %2671 = vst [vmem:[#allocation8 + $0x208] sm:$0xff] %v2415
    %2672 = vst [vmem:[#allocation8 + $0x210] sm:$0xff] %v2416
    %2673 = vst [vmem:[#allocation8 + $0x218] sm:$0xff] %v2417
    %2674 = vst [vmem:[#allocation8 + $0x220] sm:$0xff] %v2418
    %2675 = vst [vmem:[#allocation8 + $0x228] sm:$0xff] %v2419
    %2676 = vst [vmem:[#allocation8 + $0x230] sm:$0xff] %v2420
    %2677 = vst [vmem:[#allocation8 + $0x238] sm:$0xff] %v2421
    %2678 = vst [vmem:[#allocation8 + $0x240] sm:$0xff] %v2422
    %2679 = vst [vmem:[#allocation8 + $0x248] sm:$0xff] %v2423
    %2680 = vst [vmem:[#allocation8 + $0x250] sm:$0xff] %v2424
    %2681 = vst [vmem:[#allocation8 + $0x258] sm:$0xff] %v2425
    %2682 = vst [vmem:[#allocation8 + $0x260] sm:$0xff] %v2426
    %2683 = vst [vmem:[#allocation8 + $0x268] sm:$0xff] %v2427
    %2684 = vst [vmem:[#allocation8 + $0x270] sm:$0xff] %v2428
    %2685 = vst [vmem:[#allocation8 + $0x278] sm:$0xff] %v2429
    %2686 = vst [vmem:[#allocation8 + $0x280] sm:$0xff] %v2430
    %2687 = vst [vmem:[#allocation8 + $0x288] sm:$0xff] %v2431
    %2688 = vst [vmem:[#allocation8 + $0x290] sm:$0xff] %v2432
    %2689 = vst [vmem:[#allocation8 + $0x298] sm:$0xff] %v2433
    %2690 = vst [vmem:[#allocation8 + $0x2a0] sm:$0xff] %v2434
    %2691 = vst [vmem:[#allocation8 + $0x2a8] sm:$0xff] %v2435
    %2692 = vst [vmem:[#allocation8 + $0x2b0] sm:$0xff] %v2436
    %2693 = vst [vmem:[#allocation8 + $0x2b8] sm:$0xff] %v2437
    %2694 = vst [vmem:[#allocation8 + $0x2c0] sm:$0xff] %v2438
    %2695 = vst [vmem:[#allocation8 + $0x2c8] sm:$0xff] %v2439
    %2696 = vst [vmem:[#allocation8 + $0x2d0] sm:$0xff] %v2440
    %2697 = vst [vmem:[#allocation8 + $0x2d8] sm:$0xff] %v2441
    %2698 = vst [vmem:[#allocation8 + $0x2e0] sm:$0xff] %v2442
    %2699 = vst [vmem:[#allocation8 + $0x2e8] sm:$0xff] %v2443
    %2700 = vst [vmem:[#allocation8 + $0x2f0] sm:$0xff] %v2444
    %2701 = vst [vmem:[#allocation8 + $0x2f8] sm:$0xff] %v2445
    %2702 = vst [vmem:[#allocation8 + $0x300] sm:$0xff] %v2446
    %2703 = vst [vmem:[#allocation8 + $0x308] sm:$0xff] %v2447
    %2704 = vst [vmem:[#allocation8 + $0x310] sm:$0xff] %v2448
    %2705 = vst [vmem:[#allocation8 + $0x318] sm:$0xff] %v2449
    %2706 = vst [vmem:[#allocation8 + $0x320] sm:$0xff] %v2450
    %2707 = vst [vmem:[#allocation8 + $0x328] sm:$0xff] %v2451
    %2708 = vst [vmem:[#allocation8 + $0x330] sm:$0xff] %v2452
    %2709 = vst [vmem:[#allocation8 + $0x338] sm:$0xff] %v2453
    %2710 = vst [vmem:[#allocation8 + $0x340] sm:$0xff] %v2454
    %2711 = vst [vmem:[#allocation8 + $0x348] sm:$0xff] %v2455
    %2712 = vst [vmem:[#allocation8 + $0x350] sm:$0xff] %v2456
    %2713 = vst [vmem:[#allocation8 + $0x358] sm:$0xff] %v2457
    %2714 = vst [vmem:[#allocation8 + $0x360] sm:$0xff] %v2458
    %2715 = vst [vmem:[#allocation8 + $0x368] sm:$0xff] %v2459
    %2716 = vst [vmem:[#allocation8 + $0x370] sm:$0xff] %v2460
    %2717 = vst [vmem:[#allocation8 + $0x378] sm:$0xff] %v2461
    %2718 = vst [vmem:[#allocation8 + $0x380] sm:$0xff] %v2462
    %2719 = vst [vmem:[#allocation8 + $0x388] sm:$0xff] %v2463
    %2720 = vst [vmem:[#allocation8 + $0x390] sm:$0xff] %v2464
    %2721 = vst [vmem:[#allocation8 + $0x398] sm:$0xff] %v2465
    %2722 = vst [vmem:[#allocation8 + $0x3a0] sm:$0xff] %v2466
    %2723 = vst [vmem:[#allocation8 + $0x3a8] sm:$0xff] %v2467
    %2724 = vst [vmem:[#allocation8 + $0x3b0] sm:$0xff] %v2468
    %2725 = vst [vmem:[#allocation8 + $0x3b8] sm:$0xff] %v2469
    %2726 = vst [vmem:[#allocation8 + $0x3c0] sm:$0xff] %v2470
    %2727 = vst [vmem:[#allocation8 + $0x3c8] sm:$0xff] %v2471
    %2728 = vst [vmem:[#allocation8 + $0x3d0] sm:$0xff] %v2472
    %2729 = vst [vmem:[#allocation8 + $0x3d8] sm:$0xff] %v2473
    %2730 = vst [vmem:[#allocation8 + $0x3e0] sm:$0xff] %v2474
    %2731 = vst [vmem:[#allocation8 + $0x3e8] sm:$0xff] %v2475
    %2732 = vst [vmem:[#allocation8 + $0x3f0] sm:$0xff] %v2476
    %2733 = vst [vmem:[#allocation8 + $0x3f8] sm:$0xff] %v2477
    %2734 = vst [vmem:[#allocation8 + $0x400] sm:$0xff] %v2478
    %2735 = vst [vmem:[#allocation8 + $0x408] sm:$0xff] %v2479
    %2736 = vst [vmem:[#allocation8 + $0x410] sm:$0xff] %v2480
    %2737 = vst [vmem:[#allocation8 + $0x418] sm:$0xff] %v2481
    %2738 = vst [vmem:[#allocation8 + $0x420] sm:$0xff] %v2482
    %2739 = vst [vmem:[#allocation8 + $0x428] sm:$0xff] %v2483
    %2740 = vst [vmem:[#allocation8 + $0x430] sm:$0xff] %v2484
    %2741 = vst [vmem:[#allocation8 + $0x438] sm:$0xff] %v2485
    %2742 = vst [vmem:[#allocation8 + $0x440] sm:$0xff] %v2486
    %2743 = vst [vmem:[#allocation8 + $0x448] sm:$0xff] %v2487
    %2744 = vst [vmem:[#allocation8 + $0x450] sm:$0xff] %v2488
    %2745 = vst [vmem:[#allocation8 + $0x458] sm:$0xff] %v2489
    %2746 = vst [vmem:[#allocation8 + $0x460] sm:$0xff] %v2490
    %2747 = vst [vmem:[#allocation8 + $0x468] sm:$0xff] %v2491
    %2748 = vst [vmem:[#allocation8 + $0x470] sm:$0xff] %v2492
    %2749 = vst [vmem:[#allocation8 + $0x478] sm:$0xff] %v2493
    %2750 = vst [vmem:[#allocation8 + $0x480] sm:$0xff] %v2494
    %2751 = vst [vmem:[#allocation8 + $0x488] sm:$0xff] %v2495
    %2752 = vst [vmem:[#allocation8 + $0x490] sm:$0xff] %v2496
    %2753 = vst [vmem:[#allocation8 + $0x498] sm:$0xff] %v2497
    %2754 = vst [vmem:[#allocation8 + $0x4a0] sm:$0xff] %v2498
    %2755 = vst [vmem:[#allocation8 + $0x4a8] sm:$0xff] %v2499
    %2756 = vst [vmem:[#allocation8 + $0x4b0] sm:$0xff] %v2500
    %2757 = vst [vmem:[#allocation8 + $0x4b8] sm:$0xff] %v2501
    %2758 = vst [vmem:[#allocation8 + $0x4c0] sm:$0xff] %v2502
    %2759 = vst [vmem:[#allocation8 + $0x4c8] sm:$0xff] %v2503
    %2760 = vst [vmem:[#allocation8 + $0x4d0] sm:$0xff] %v2504
    %2761 = vst [vmem:[#allocation8 + $0x4d8] sm:$0xff] %v2505
    %2762 = vst [vmem:[#allocation8 + $0x4e0] sm:$0xff] %v2506
    %2763 = vst [vmem:[#allocation8 + $0x4e8] sm:$0xff] %v2507
    %2764 = vst [vmem:[#allocation8 + $0x4f0] sm:$0xff] %v2508
    %2765 = vst [vmem:[#allocation8 + $0x4f8] sm:$0xff] %v2509
    %2766 = vst [vmem:[#allocation8 + $0x500] sm:$0xff] %v2510
    %2767 = vst [vmem:[#allocation8 + $0x508] sm:$0xff] %v2511
    %2768 = vst [vmem:[#allocation8 + $0x510] sm:$0xff] %v2512
    %2769 = vst [vmem:[#allocation8 + $0x518] sm:$0xff] %v2513
    %2770 = vst [vmem:[#allocation8 + $0x520] sm:$0xff] %v2514
    %2771 = vst [vmem:[#allocation8 + $0x528] sm:$0xff] %v2515
    %2772 = vst [vmem:[#allocation8 + $0x530] sm:$0xff] %v2516
    %2773 = vst [vmem:[#allocation8 + $0x538] sm:$0xff] %v2517
    %2774 = vst [vmem:[#allocation8 + $0x540] sm:$0xff] %v2518
    %2775 = vst [vmem:[#allocation8 + $0x548] sm:$0xff] %v2519
    %2776 = vst [vmem:[#allocation8 + $0x550] sm:$0xff] %v2520
    %2777 = vst [vmem:[#allocation8 + $0x558] sm:$0xff] %v2521
    %2778 = vst [vmem:[#allocation8 + $0x560] sm:$0xff] %v2522
    %2779 = vst [vmem:[#allocation8 + $0x568] sm:$0xff] %v2523
    %2780 = vst [vmem:[#allocation8 + $0x570] sm:$0xff] %v2524
    %2781 = vst [vmem:[#allocation8 + $0x578] sm:$0xff] %v2525
    %2782 = vst [vmem:[#allocation8 + $0x580] sm:$0xff] %v2526
    %2783 = vst [vmem:[#allocation8 + $0x588] sm:$0xff] %v2527
    %2784 = vst [vmem:[#allocation8 + $0x590] sm:$0xff] %v2528
    %2785 = vst [vmem:[#allocation8 + $0x598] sm:$0xff] %v2529
    %2786 = vst [vmem:[#allocation8 + $0x5a0] sm:$0xff] %v2530
    %2787 = vst [vmem:[#allocation8 + $0x5a8] sm:$0xff] %v2531
    %2788 = vst [vmem:[#allocation8 + $0x5b0] sm:$0xff] %v2532
    %2789 = vst [vmem:[#allocation8 + $0x5b8] sm:$0xff] %v2533
    %2790 = vst [vmem:[#allocation8 + $0x5c0] sm:$0xff] %v2534
    %2791 = vst [vmem:[#allocation8 + $0x5c8] sm:$0xff] %v2535
    %2792 = vst [vmem:[#allocation8 + $0x5d0] sm:$0xff] %v2536
    %2793 = vst [vmem:[#allocation8 + $0x5d8] sm:$0xff] %v2537
    %2794 = vst [vmem:[#allocation8 + $0x5e0] sm:$0xff] %v2538
    %2795 = vst [vmem:[#allocation8 + $0x5e8] sm:$0xff] %v2539
    %2796 = vst [vmem:[#allocation8 + $0x5f0] sm:$0xff] %v2540
    %2797 = vst [vmem:[#allocation8 + $0x5f8] sm:$0xff] %v2541
    %2798 = vst [vmem:[#allocation8 + $0x600] sm:$0xff] %v2542
    %2799 = vst [vmem:[#allocation8 + $0x608] sm:$0xff] %v2543
    %2800 = vst [vmem:[#allocation8 + $0x610] sm:$0xff] %v2544
    %2801 = vst [vmem:[#allocation8 + $0x618] sm:$0xff] %v2545
    %2802 = vst [vmem:[#allocation8 + $0x620] sm:$0xff] %v2546
    %2803 = vst [vmem:[#allocation8 + $0x628] sm:$0xff] %v2547
    %2804 = vst [vmem:[#allocation8 + $0x630] sm:$0xff] %v2548
    %2805 = vst [vmem:[#allocation8 + $0x638] sm:$0xff] %v2549
    %2806 = vst [vmem:[#allocation8 + $0x640] sm:$0xff] %v2550
    %2807 = vst [vmem:[#allocation8 + $0x648] sm:$0xff] %v2551
    %2808 = vst [vmem:[#allocation8 + $0x650] sm:$0xff] %v2552
    %2809 = vst [vmem:[#allocation8 + $0x658] sm:$0xff] %v2553
    %2810 = vst [vmem:[#allocation8 + $0x660] sm:$0xff] %v2554
    %2811 = vst [vmem:[#allocation8 + $0x668] sm:$0xff] %v2555
    %2812 = vst [vmem:[#allocation8 + $0x670] sm:$0xff] %v2556
    %2813 = vst [vmem:[#allocation8 + $0x678] sm:$0xff] %v2557
    %2814 = vst [vmem:[#allocation8 + $0x680] sm:$0xff] %v2558
    %2815 = vst [vmem:[#allocation8 + $0x688] sm:$0xff] %v2559
    %2816 = vst [vmem:[#allocation8 + $0x690] sm:$0xff] %v2560
    %2817 = vst [vmem:[#allocation8 + $0x698] sm:$0xff] %v2561
    %2818 = vst [vmem:[#allocation8 + $0x6a0] sm:$0xff] %v2562
    %2819 = vst [vmem:[#allocation8 + $0x6a8] sm:$0xff] %v2563
    %2820 = vst [vmem:[#allocation8 + $0x6b0] sm:$0xff] %v2564
    %2821 = vst [vmem:[#allocation8 + $0x6b8] sm:$0xff] %v2565
    %2822 = vst [vmem:[#allocation8 + $0x6c0] sm:$0xff] %v2566
    %2823 = vst [vmem:[#allocation8 + $0x6c8] sm:$0xff] %v2567
    %2824 = vst [vmem:[#allocation8 + $0x6d0] sm:$0xff] %v2568
    %2825 = vst [vmem:[#allocation8 + $0x6d8] sm:$0xff] %v2569
    %2826 = vst [vmem:[#allocation8 + $0x6e0] sm:$0xff] %v2570
    %2827 = vst [vmem:[#allocation8 + $0x6e8] sm:$0xff] %v2571
    %2828 = vst [vmem:[#allocation8 + $0x6f0] sm:$0xff] %v2572
    %2829 = vst [vmem:[#allocation8 + $0x6f8] sm:$0xff] %v2573
    %2830 = vst [vmem:[#allocation8 + $0x700] sm:$0xff] %v2574
    %2831 = vst [vmem:[#allocation8 + $0x708] sm:$0xff] %v2575
    %2832 = vst [vmem:[#allocation8 + $0x710] sm:$0xff] %v2576
    %2833 = vst [vmem:[#allocation8 + $0x718] sm:$0xff] %v2577
    %2834 = vst [vmem:[#allocation8 + $0x720] sm:$0xff] %v2578
    %2835 = vst [vmem:[#allocation8 + $0x728] sm:$0xff] %v2579
    %2836 = vst [vmem:[#allocation8 + $0x730] sm:$0xff] %v2580
    %2837 = vst [vmem:[#allocation8 + $0x738] sm:$0xff] %v2581
    %2838 = vst [vmem:[#allocation8 + $0x740] sm:$0xff] %v2582
    %2839 = vst [vmem:[#allocation8 + $0x748] sm:$0xff] %v2583
    %2840 = vst [vmem:[#allocation8 + $0x750] sm:$0xff] %v2584
    %2841 = vst [vmem:[#allocation8 + $0x758] sm:$0xff] %v2585
    %2842 = vst [vmem:[#allocation8 + $0x760] sm:$0xff] %v2586
    %2843 = vst [vmem:[#allocation8 + $0x768] sm:$0xff] %v2587
    %2844 = vst [vmem:[#allocation8 + $0x770] sm:$0xff] %v2588
    %2845 = vst [vmem:[#allocation8 + $0x778] sm:$0xff] %v2589
    %2846 = vst [vmem:[#allocation8 + $0x780] sm:$0xff] %v2590
    %2847 = vst [vmem:[#allocation8 + $0x788] sm:$0xff] %v2591
    %2848 = vst [vmem:[#allocation8 + $0x790] sm:$0xff] %v2592
    %2849 = vst [vmem:[#allocation8 + $0x798] sm:$0xff] %v2593
    %2850 = vst [vmem:[#allocation8 + $0x7a0] sm:$0xff] %v2594
    %2851 = vst [vmem:[#allocation8 + $0x7a8] sm:$0xff] %v2595
    %2852 = vst [vmem:[#allocation8 + $0x7b0] sm:$0xff] %v2596
    %2853 = vst [vmem:[#allocation8 + $0x7b8] sm:$0xff] %v2597
    %2854 = vst [vmem:[#allocation8 + $0x7c0] sm:$0xff] %v2598
    %2855 = vst [vmem:[#allocation8 + $0x7c8] sm:$0xff] %v2599
    %2856 = vst [vmem:[#allocation8 + $0x7d0] sm:$0xff] %v2600
    %2857 = vst [vmem:[#allocation8 + $0x7d8] sm:$0xff] %v2601
    %2858 = vst [vmem:[#allocation8 + $0x7e0] sm:$0xff] %v2602
    %2859 = vst [vmem:[#allocation8 + $0x7e8] sm:$0xff] %v2603
    %2860 = vst [vmem:[#allocation8 + $0x7f0] sm:$0xff] %v2604
    %2861 = vst [vmem:[#allocation8 + $0x7f8] sm:$0xff] %v2605
    // Predicated region
    $region34: #{tpu_custom_call.1} parent=1 // pred_check
      _
    $region35: #{tpu_custom_call.1} parent=1 // pred_check_branch
      %2863 = sbr.rel (0) target = $region37
    $region36: #{tpu_custom_call.1} parent=1 // pred_region
      %s2865 = ssub.s32 32768, 32768
      %2866 = vsyncadd [#allocation4], %s2865
      %s2867 = sshll.u32 [#allocation8], 4
      %s2868 = int_to_ptr.vmem [resolvable:$true] %s2867
      %2873 = dma.vmem_to_hbm [thread:$0]  %s2868, 32768, %s5, [#allocation4], 256, 256, 16
    $region37: #{tpu_custom_call.1} parent=1 // pred_fallthru
      _
    // Predicated region
    $region38: #{tpu_custom_call.1} parent=1 // pred_check
      _
    $region39: #{tpu_custom_call.1} parent=1 // pred_check_branch
      %2875 = sbr.rel (0) target = $region41
    $region40: #{tpu_custom_call.1} parent=1 // pred_region
      %2876 = dma.done [#allocation4], 32768
    $region41: #{tpu_custom_call.1} parent=1 // pred_fallthru
      _
    %2877 = vsyncpa [#allocation3], 1
    %2878 = vsyncpa [#allocation6], 1
    %2879 = vsyncpa [#allocation4], 1

</llo_original>
